<compile_context>
chip_gen: v6e
topology: v6e:2x2x1
jax: 0.10.0
libtpu: 0.0.40
codegen_flags: <defaults>
</compile_context>

<pallas_src>
import math

import jax
import jax.numpy as jnp
import numpy as np
from jax import lax
from jax.experimental import pallas as pl
from jax.experimental.pallas import tpu as pltpu


def _round_up(v, m):
    return ((v + m - 1) // m) * m


def _lstm_kernel(x_ref, wih_ref, whh_ref, b_ref, out_ref, xproj_scr):
    # x_ref:     (S*Bp, I)     all timesteps flattened, batch padded to sublane
    # wih_ref:   (I, 4*Hp)     input->gate weights, each gate padded to Hp lanes
    # whh_ref:   (Hp, 4*Hp)    hidden->gate weights (contraction dim also padded)
    # b_ref:     (1, 4*Hp)     bias_ih + bias_hh (per-gate padded)
    # out_ref:   (S, Bp, Hp)   hidden state for every timestep (padded)
    # xproj_scr: (S*Bp, 4*Hp)  scratch for hoisted input projection
    S, Bp, Hp = out_ref.shape

    # ---- Hoisted input projection: one well-utilized MXU matmul, all timesteps.
    xproj_scr[...] = (
        jnp.dot(x_ref[...], wih_ref[...], preferred_element_type=jnp.float32)
        + b_ref[...]
    )

    # ---- Sequential recurrence: only h_{t-1} @ W_hh per step.
    def step(t, carry):
        h, c = carry
        base = pl.multiple_of(t * Bp, Bp)
        gates = xproj_scr[pl.ds(base, Bp), :] + jnp.dot(
            h, whh_ref[...], preferred_element_type=jnp.float32
        )
        # PyTorch gate order [i, f, g, o]; slices are lane-aligned (Hp % 128 == 0).
        i_g = jax.nn.sigmoid(gates[:, 0 * Hp:1 * Hp])
        f_g = jax.nn.sigmoid(gates[:, 1 * Hp:2 * Hp])
        g_g = jnp.tanh(gates[:, 2 * Hp:3 * Hp])
        o_g = jax.nn.sigmoid(gates[:, 3 * Hp:4 * Hp])
        c_new = f_g * c + i_g * g_g
        h_new = o_g * jnp.tanh(c_new)
        out_ref[t] = h_new.astype(out_ref.dtype)
        return h_new, c_new

    # Zero initial (h0, c0) -- PyTorch default. Carries live in vregs.
    h0 = jnp.zeros((Bp, Hp), jnp.float32)
    c0 = jnp.zeros((Bp, Hp), jnp.float32)
    lax.fori_loop(0, S, step, (h0, c0), unroll=True)


def lstm_forward(x, weight_ih, weight_hh, bias_ih, bias_hh):
    """x: (S, B, I) f32. weight_ih: (4H, I), weight_hh: (4H, H), biases: (4H,).

    Returns out_lstm: (S, B, H) f32 — same semantics as
    `out, _ = torch.nn.LSTM(I, H)(x)` with zero initial state.
    """
    S, B, I = x.shape
    H = weight_ih.shape[0] // 4
    Hp = _round_up(H, 128)  # lane-align each gate
    Bp = _round_up(B, 8)    # pad batch to a full sublane

    x = jnp.asarray(x, jnp.float32)
    w_ih = jnp.asarray(weight_ih, jnp.float32).reshape(4, H, I)   # [gate, out_h, in]
    w_hh = jnp.asarray(weight_hh, jnp.float32).reshape(4, H, H)   # [gate, out_h, in_h]
    b = (jnp.asarray(bias_ih, jnp.float32)
         + jnp.asarray(bias_hh, jnp.float32)).reshape(4, H)

    # Zero-pad per-gate output dim H->Hp (and the recurrent contraction dim H->Hp);
    # padded lanes stay exactly zero through the recurrence.
    w_ih_p = jnp.pad(w_ih, ((0, 0), (0, Hp - H), (0, 0))).reshape(4 * Hp, I).T        # (I, 4Hp)
    w_hh_p = jnp.pad(w_hh, ((0, 0), (0, Hp - H), (0, Hp - H))).reshape(4 * Hp, Hp).T  # (Hp, 4Hp)
    b_p = jnp.pad(b, ((0, 0), (0, Hp - H))).reshape(1, 4 * Hp)

    # Pad batch and flatten (S, Bp, I) -> (S*Bp, I) for the batched input projection.
    x_p = jnp.pad(x, ((0, 0), (0, Bp - B), (0, 0))).reshape(S * Bp, I)

    out_p = pl.pallas_call(
        _lstm_kernel,
        out_shape=jax.ShapeDtypeStruct((S, Bp, Hp), jnp.float32),
        grid_spec=pltpu.PrefetchScalarGridSpec(
            num_scalar_prefetch=0,
            grid=(1,),  # single invocation: whole sequence handled in-kernel
            in_specs=[
                pl.BlockSpec((S * Bp, I), lambda i: (0, 0)),
                pl.BlockSpec((I, 4 * Hp), lambda i: (0, 0)),
                pl.BlockSpec((Hp, 4 * Hp), lambda i: (0, 0)),
                pl.BlockSpec((1, 4 * Hp), lambda i: (0, 0)),
            ],
            out_specs=pl.BlockSpec((S, Bp, Hp), lambda i: (0, 0, 0)),
            scratch_shapes=[
                pltpu.VMEM((S * Bp, 4 * Hp), jnp.float32),  # hoisted x-projection
            ],
        ),
        compiler_params=pltpu.CompilerParams(
            dimension_semantics=("arbitrary",),
        ),
    )(x_p, w_ih_p, w_hh_p, b_p)

    return out_p[:, :B, :H]


def _lstm_reference(x, weight_ih, weight_hh, bias_ih, bias_hh):
    """Pure-JAX reference (lax.scan) for correctness checking."""
    S, B, I = x.shape
    H = weight_ih.shape[0] // 4
    wih_t = weight_ih.T
    whh_t = weight_hh.T
    b = bias_ih + bias_hh

    def step(carry, x_t):
        h, c = carry
        gates = x_t @ wih_t + h @ whh_t + b
        i_g = jax.nn.sigmoid(gates[:, 0 * H:1 * H])
        f_g = jax.nn.sigmoid(gates[:, 1 * H:2 * H])
        g_g = jnp.tanh(gates[:, 2 * H:3 * H])
        o_g = jax.nn.sigmoid(gates[:, 3 * H:4 * H])
        c_new = f_g * c + i_g * g_g
        h_new = o_g * jnp.tanh(c_new)
        return (h_new, c_new), h_new

    h0 = jnp.zeros((B, H), jnp.float32)
    c0 = jnp.zeros((B, H), jnp.float32)
    _, hs = lax.scan(step, (h0, c0), x)
    return hs


if __name__ == "__main__":
    # Small shapes consistent with the module: seq=8, batch=2, n_input=16, n_hidden=32
    SEQ, BATCH, N_INPUT, N_HIDDEN = 8, 2, 16, 32

    key = jax.random.PRNGKey(0)
    kx, k1, k2, k3, k4 = jax.random.split(key, 5)

    # PyTorch LSTM default init: U(-1/sqrt(H), 1/sqrt(H)), gate order [i, f, g, o].
    bound = 1.0 / math.sqrt(N_HIDDEN)
    x = jax.random.normal(kx, (SEQ, BATCH, N_INPUT), jnp.float32)
    weight_ih = jax.random.uniform(k1, (4 * N_HIDDEN, N_INPUT), jnp.float32, -bound, bound)
    weight_hh = jax.random.uniform(k2, (4 * N_HIDDEN, N_HIDDEN), jnp.float32, -bound, bound)
    bias_ih = jax.random.uniform(k3, (4 * N_HIDDEN,), jnp.float32, -bound, bound)
    bias_hh = jax.random.uniform(k4, (4 * N_HIDDEN,), jnp.float32, -bound, bound)

    out = lstm_forward(x, weight_ih, weight_hh, bias_ih, bias_hh)
    out = jax.block_until_ready(out)

    ref = _lstm_reference(x, weight_ih, weight_hh, bias_ih, bias_hh)
    assert out.shape == (SEQ, BATCH, N_HIDDEN)
    np.testing.assert_allclose(np.asarray(out), np.asarray(ref), rtol=1e-5, atol=1e-5)

    print("KERNEL_OK")
</pallas_src>

<mosaic_0001>
module attributes {stable_mosaic.version = 11 : i64} {
  func.func @_lstm_kernel(%arg0: i32, %arg1: memref<64x16xf32, #tpu.memory_space<vmem>>, %arg2: memref<16x512xf32, #tpu.memory_space<vmem>>, %arg3: memref<128x512xf32, #tpu.memory_space<vmem>>, %arg4: memref<1x512xf32, #tpu.memory_space<vmem>>, %arg5: memref<8x8x128xf32, #tpu.memory_space<vmem>>, %arg6: memref<64x512xf32, #tpu.memory_space<vmem>>) attributes {dimension_semantics = [#tpu.dimension_semantics<arbitrary>], iteration_bounds = array<i64: 1>, scalar_prefetch = 0 : i64, scratch_operands = 1 : i64, tpu.core_type = #tpu.core_type<tc>, window_params = [{pipeline_mode = #tpu.pipeline_mode<synchronous>, transform_indices = @transform_0, window_bounds = array<i64: 64, 16>}, {pipeline_mode = #tpu.pipeline_mode<synchronous>, transform_indices = @transform_1, window_bounds = array<i64: 16, 512>}, {pipeline_mode = #tpu.pipeline_mode<synchronous>, transform_indices = @transform_2, window_bounds = array<i64: 128, 512>}, {pipeline_mode = #tpu.pipeline_mode<synchronous>, transform_indices = @transform_3, window_bounds = array<i64: 1, 512>}, {pipeline_mode = #tpu.pipeline_mode<synchronous>, transform_indices = @transform_4, window_bounds = array<i64: 8, 8, 128>}]} {
    %c0 = arith.constant 0 : index
    %c0_0 = arith.constant 0 : index
    %0 = vector.load %arg1[%c0, %c0_0] : memref<64x16xf32, #tpu.memory_space<vmem>>, vector<64x16xf32>
    %c0_1 = arith.constant 0 : index
    %c0_2 = arith.constant 0 : index
    %1 = vector.load %arg2[%c0_1, %c0_2] : memref<16x512xf32, #tpu.memory_space<vmem>>, vector<16x512xf32>
    %cst = arith.constant dense<0.000000e+00> : vector<64x512xf32>
    %2 = tpu.matmul %0, %1, %cst {dimension_numbers = #tpu.dot_dimension_numbers<[1], [0], [0], [1], [0, 0, 1, 1], [], []>} : vector<64x16xf32>, vector<16x512xf32>, vector<64x512xf32> -> vector<64x512xf32>
    %c0_3 = arith.constant 0 : index
    %c0_4 = arith.constant 0 : index
    %3 = vector.load %arg4[%c0_3, %c0_4] : memref<1x512xf32, #tpu.memory_space<vmem>>, vector<1x512xf32>
    %4 = vector.broadcast %3 : vector<1x512xf32> to vector<64x512xf32>
    %5 = arith.addf %2, %4 : vector<64x512xf32>
    %c0_5 = arith.constant 0 : index
    %c0_6 = arith.constant 0 : index
    %6 = vector.load %arg6[%c0_5, %c0_6] : memref<64x512xf32, #tpu.memory_space<vmem>>, vector<64x512xf32>
    tpu.vector_store %arg6[%c0_5, %c0_6], %5 {strides = array<i32>} : memref<64x512xf32, #tpu.memory_space<vmem>>, vector<64x512xf32>,
    %cst_7 = arith.constant 0.000000e+00 : f32
    %7 = vector.broadcast %cst_7 : f32 to vector<8x128xf32>
    %cst_8 = arith.constant 0.000000e+00 : f32
    %8 = vector.broadcast %cst_8 : f32 to vector<8x128xf32>
    %c0_i32 = arith.constant 0 : i32
    %c8_i32 = arith.constant 8 : i32
    %9 = arith.muli %c0_i32, %c8_i32 : i32
    %10 = tpu.assume_multiple %9, 8 : i32
    %11 = arith.index_cast %10 : i32 to index
    %c0_9 = arith.constant 0 : index
    %12 = vector.load %arg6[%11, %c0_9] : memref<64x512xf32, #tpu.memory_space<vmem>>, vector<8x512xf32>
    %c0_10 = arith.constant 0 : index
    %c0_11 = arith.constant 0 : index
    %13 = vector.load %arg3[%c0_10, %c0_11] : memref<128x512xf32, #tpu.memory_space<vmem>>, vector<128x512xf32>
    %cst_12 = arith.constant dense<0.000000e+00> : vector<8x512xf32>
    %14 = tpu.matmul %7, %13, %cst_12 {dimension_numbers = #tpu.dot_dimension_numbers<[1], [0], [0], [1], [0, 0, 1, 1], [], []>} : vector<8x128xf32>, vector<128x512xf32>, vector<8x512xf32> -> vector<8x512xf32>
    %15 = arith.addf %12, %14 : vector<8x512xf32>
    %16 = vector.extract_strided_slice %15 {offsets = [0, 0], sizes = [8, 128], strides = [1, 1]} : vector<8x512xf32> to vector<8x128xf32>
    %17 = arith.negf %16 : vector<8x128xf32>
    %18 = math.exp %17 : vector<8x128xf32>
    %cst_13 = arith.constant 1.000000e+00 : f32
    %19 = vector.broadcast %cst_13 : f32 to vector<8x128xf32>
    %20 = arith.addf %19, %18 : vector<8x128xf32>
    %21 = arith.divf %19, %20 : vector<8x128xf32>
    %22 = vector.extract_strided_slice %15 {offsets = [0, 128], sizes = [8, 128], strides = [1, 1]} : vector<8x512xf32> to vector<8x128xf32>
    %23 = arith.negf %22 : vector<8x128xf32>
    %24 = math.exp %23 : vector<8x128xf32>
    %cst_14 = arith.constant 1.000000e+00 : f32
    %25 = vector.broadcast %cst_14 : f32 to vector<8x128xf32>
    %26 = arith.addf %25, %24 : vector<8x128xf32>
    %27 = arith.divf %25, %26 : vector<8x128xf32>
    %28 = vector.extract_strided_slice %15 {offsets = [0, 256], sizes = [8, 128], strides = [1, 1]} : vector<8x512xf32> to vector<8x128xf32>
    %29 = math.tanh %28 : vector<8x128xf32>
    %30 = vector.extract_strided_slice %15 {offsets = [0, 384], sizes = [8, 128], strides = [1, 1]} : vector<8x512xf32> to vector<8x128xf32>
    %31 = arith.negf %30 : vector<8x128xf32>
    %32 = math.exp %31 : vector<8x128xf32>
    %cst_15 = arith.constant 1.000000e+00 : f32
    %33 = vector.broadcast %cst_15 : f32 to vector<8x128xf32>
    %34 = arith.addf %33, %32 : vector<8x128xf32>
    %35 = arith.divf %33, %34 : vector<8x128xf32>
    %36 = arith.mulf %27, %8 : vector<8x128xf32>
    %37 = arith.mulf %21, %29 : vector<8x128xf32>
    %38 = arith.addf %36, %37 : vector<8x128xf32>
    %39 = math.tanh %38 : vector<8x128xf32>
    %40 = arith.mulf %35, %39 : vector<8x128xf32>
    %41 = arith.index_cast %c0_i32 : i32 to index
    %c0_16 = arith.constant 0 : index
    %c0_17 = arith.constant 0 : index
    %42 = vector.load %arg5[%41, %c0_16, %c0_17] : memref<8x8x128xf32, #tpu.memory_space<vmem>>, vector<1x8x128xf32>
    %43 = vector.shape_cast %42 : vector<1x8x128xf32> to vector<8x128xf32>
    %44 = vector.shape_cast %40 : vector<8x128xf32> to vector<1x8x128xf32>
    tpu.vector_store %arg5[%41, %c0_16, %c0_17], %44 {strides = array<i32>} : memref<8x8x128xf32, #tpu.memory_space<vmem>>, vector<1x8x128xf32>,
    %c1_i32 = arith.constant 1 : i32
    %c8_i32_18 = arith.constant 8 : i32
    %45 = arith.muli %c1_i32, %c8_i32_18 : i32
    %46 = tpu.assume_multiple %45, 8 : i32
    %47 = arith.index_cast %46 : i32 to index
    %c0_19 = arith.constant 0 : index
    %48 = vector.load %arg6[%47, %c0_19] : memref<64x512xf32, #tpu.memory_space<vmem>>, vector<8x512xf32>
    %c0_20 = arith.constant 0 : index
    %c0_21 = arith.constant 0 : index
    %49 = vector.load %arg3[%c0_20, %c0_21] : memref<128x512xf32, #tpu.memory_space<vmem>>, vector<128x512xf32>
    %cst_22 = arith.constant dense<0.000000e+00> : vector<8x512xf32>
    %50 = tpu.matmul %40, %49, %cst_22 {dimension_numbers = #tpu.dot_dimension_numbers<[1], [0], [0], [1], [0, 0, 1, 1], [], []>} : vector<8x128xf32>, vector<128x512xf32>, vector<8x512xf32> -> vector<8x512xf32>
    %51 = arith.addf %48, %50 : vector<8x512xf32>
    %52 = vector.extract_strided_slice %51 {offsets = [0, 0], sizes = [8, 128], strides = [1, 1]} : vector<8x512xf32> to vector<8x128xf32>
    %53 = arith.negf %52 : vector<8x128xf32>
    %54 = math.exp %53 : vector<8x128xf32>
    %cst_23 = arith.constant 1.000000e+00 : f32
    %55 = vector.broadcast %cst_23 : f32 to vector<8x128xf32>
    %56 = arith.addf %55, %54 : vector<8x128xf32>
    %57 = arith.divf %55, %56 : vector<8x128xf32>
    %58 = vector.extract_strided_slice %51 {offsets = [0, 128], sizes = [8, 128], strides = [1, 1]} : vector<8x512xf32> to vector<8x128xf32>
    %59 = arith.negf %58 : vector<8x128xf32>
    %60 = math.exp %59 : vector<8x128xf32>
    %cst_24 = arith.constant 1.000000e+00 : f32
    %61 = vector.broadcast %cst_24 : f32 to vector<8x128xf32>
    %62 = arith.addf %61, %60 : vector<8x128xf32>
    %63 = arith.divf %61, %62 : vector<8x128xf32>
    %64 = vector.extract_strided_slice %51 {offsets = [0, 256], sizes = [8, 128], strides = [1, 1]} : vector<8x512xf32> to vector<8x128xf32>
    %65 = math.tanh %64 : vector<8x128xf32>
    %66 = vector.extract_strided_slice %51 {offsets = [0, 384], sizes = [8, 128], strides = [1, 1]} : vector<8x512xf32> to vector<8x128xf32>
    %67 = arith.negf %66 : vector<8x128xf32>
    %68 = math.exp %67 : vector<8x128xf32>
    %cst_25 = arith.constant 1.000000e+00 : f32
    %69 = vector.broadcast %cst_25 : f32 to vector<8x128xf32>
    %70 = arith.addf %69, %68 : vector<8x128xf32>
    %71 = arith.divf %69, %70 : vector<8x128xf32>
    %72 = arith.mulf %63, %38 : vector<8x128xf32>
    %73 = arith.mulf %57, %65 : vector<8x128xf32>
    %74 = arith.addf %72, %73 : vector<8x128xf32>
    %75 = math.tanh %74 : vector<8x128xf32>
    %76 = arith.mulf %71, %75 : vector<8x128xf32>
    %77 = arith.index_cast %c1_i32 : i32 to index
    %c0_26 = arith.constant 0 : index
    %c0_27 = arith.constant 0 : index
    %78 = vector.load %arg5[%77, %c0_26, %c0_27] : memref<8x8x128xf32, #tpu.memory_space<vmem>>, vector<1x8x128xf32>
    %79 = vector.shape_cast %78 : vector<1x8x128xf32> to vector<8x128xf32>
    %80 = vector.shape_cast %76 : vector<8x128xf32> to vector<1x8x128xf32>
    tpu.vector_store %arg5[%77, %c0_26, %c0_27], %80 {strides = array<i32>} : memref<8x8x128xf32, #tpu.memory_space<vmem>>, vector<1x8x128xf32>,
    %c2_i32 = arith.constant 2 : i32
    %c8_i32_28 = arith.constant 8 : i32
    %81 = arith.muli %c2_i32, %c8_i32_28 : i32
    %82 = tpu.assume_multiple %81, 8 : i32
    %83 = arith.index_cast %82 : i32 to index
    %c0_29 = arith.constant 0 : index
    %84 = vector.load %arg6[%83, %c0_29] : memref<64x512xf32, #tpu.memory_space<vmem>>, vector<8x512xf32>
    %c0_30 = arith.constant 0 : index
    %c0_31 = arith.constant 0 : index
    %85 = vector.load %arg3[%c0_30, %c0_31] : memref<128x512xf32, #tpu.memory_space<vmem>>, vector<128x512xf32>
    %cst_32 = arith.constant dense<0.000000e+00> : vector<8x512xf32>
    %86 = tpu.matmul %76, %85, %cst_32 {dimension_numbers = #tpu.dot_dimension_numbers<[1], [0], [0], [1], [0, 0, 1, 1], [], []>} : vector<8x128xf32>, vector<128x512xf32>, vector<8x512xf32> -> vector<8x512xf32>
    %87 = arith.addf %84, %86 : vector<8x512xf32>
    %88 = vector.extract_strided_slice %87 {offsets = [0, 0], sizes = [8, 128], strides = [1, 1]} : vector<8x512xf32> to vector<8x128xf32>
    %89 = arith.negf %88 : vector<8x128xf32>
    %90 = math.exp %89 : vector<8x128xf32>
    %cst_33 = arith.constant 1.000000e+00 : f32
    %91 = vector.broadcast %cst_33 : f32 to vector<8x128xf32>
    %92 = arith.addf %91, %90 : vector<8x128xf32>
    %93 = arith.divf %91, %92 : vector<8x128xf32>
    %94 = vector.extract_strided_slice %87 {offsets = [0, 128], sizes = [8, 128], strides = [1, 1]} : vector<8x512xf32> to vector<8x128xf32>
    %95 = arith.negf %94 : vector<8x128xf32>
    %96 = math.exp %95 : vector<8x128xf32>
    %cst_34 = arith.constant 1.000000e+00 : f32
    %97 = vector.broadcast %cst_34 : f32 to vector<8x128xf32>
    %98 = arith.addf %97, %96 : vector<8x128xf32>
    %99 = arith.divf %97, %98 : vector<8x128xf32>
    %100 = vector.extract_strided_slice %87 {offsets = [0, 256], sizes = [8, 128], strides = [1, 1]} : vector<8x512xf32> to vector<8x128xf32>
    %101 = math.tanh %100 : vector<8x128xf32>
    %102 = vector.extract_strided_slice %87 {offsets = [0, 384], sizes = [8, 128], strides = [1, 1]} : vector<8x512xf32> to vector<8x128xf32>
    %103 = arith.negf %102 : vector<8x128xf32>
    %104 = math.exp %103 : vector<8x128xf32>
    %cst_35 = arith.constant 1.000000e+00 : f32
    %105 = vector.broadcast %cst_35 : f32 to vector<8x128xf32>
    %106 = arith.addf %105, %104 : vector<8x128xf32>
    %107 = arith.divf %105, %106 : vector<8x128xf32>
    %108 = arith.mulf %99, %74 : vector<8x128xf32>
    %109 = arith.mulf %93, %101 : vector<8x128xf32>
    %110 = arith.addf %108, %109 : vector<8x128xf32>
    %111 = math.tanh %110 : vector<8x128xf32>
    %112 = arith.mulf %107, %111 : vector<8x128xf32>
    %113 = arith.index_cast %c2_i32 : i32 to index
    %c0_36 = arith.constant 0 : index
    %c0_37 = arith.constant 0 : index
    %114 = vector.load %arg5[%113, %c0_36, %c0_37] : memref<8x8x128xf32, #tpu.memory_space<vmem>>, vector<1x8x128xf32>
    %115 = vector.shape_cast %114 : vector<1x8x128xf32> to vector<8x128xf32>
    %116 = vector.shape_cast %112 : vector<8x128xf32> to vector<1x8x128xf32>
    tpu.vector_store %arg5[%113, %c0_36, %c0_37], %116 {strides = array<i32>} : memref<8x8x128xf32, #tpu.memory_space<vmem>>, vector<1x8x128xf32>,
    %c3_i32 = arith.constant 3 : i32
    %c8_i32_38 = arith.constant 8 : i32
    %117 = arith.muli %c3_i32, %c8_i32_38 : i32
    %118 = tpu.assume_multiple %117, 8 : i32
    %119 = arith.index_cast %118 : i32 to index
    %c0_39 = arith.constant 0 : index
    %120 = vector.load %arg6[%119, %c0_39] : memref<64x512xf32, #tpu.memory_space<vmem>>, vector<8x512xf32>
    %c0_40 = arith.constant 0 : index
    %c0_41 = arith.constant 0 : index
    %121 = vector.load %arg3[%c0_40, %c0_41] : memref<128x512xf32, #tpu.memory_space<vmem>>, vector<128x512xf32>
    %cst_42 = arith.constant dense<0.000000e+00> : vector<8x512xf32>
    %122 = tpu.matmul %112, %121, %cst_42 {dimension_numbers = #tpu.dot_dimension_numbers<[1], [0], [0], [1], [0, 0, 1, 1], [], []>} : vector<8x128xf32>, vector<128x512xf32>, vector<8x512xf32> -> vector<8x512xf32>
    %123 = arith.addf %120, %122 : vector<8x512xf32>
    %124 = vector.extract_strided_slice %123 {offsets = [0, 0], sizes = [8, 128], strides = [1, 1]} : vector<8x512xf32> to vector<8x128xf32>
    %125 = arith.negf %124 : vector<8x128xf32>
    %126 = math.exp %125 : vector<8x128xf32>
    %cst_43 = arith.constant 1.000000e+00 : f32
    %127 = vector.broadcast %cst_43 : f32 to vector<8x128xf32>
    %128 = arith.addf %127, %126 : vector<8x128xf32>
    %129 = arith.divf %127, %128 : vector<8x128xf32>
    %130 = vector.extract_strided_slice %123 {offsets = [0, 128], sizes = [8, 128], strides = [1, 1]} : vector<8x512xf32> to vector<8x128xf32>
    %131 = arith.negf %130 : vector<8x128xf32>
    %132 = math.exp %131 : vector<8x128xf32>
    %cst_44 = arith.constant 1.000000e+00 : f32
    %133 = vector.broadcast %cst_44 : f32 to vector<8x128xf32>
    %134 = arith.addf %133, %132 : vector<8x128xf32>
    %135 = arith.divf %133, %134 : vector<8x128xf32>
    %136 = vector.extract_strided_slice %123 {offsets = [0, 256], sizes = [8, 128], strides = [1, 1]} : vector<8x512xf32> to vector<8x128xf32>
    %137 = math.tanh %136 : vector<8x128xf32>
    %138 = vector.extract_strided_slice %123 {offsets = [0, 384], sizes = [8, 128], strides = [1, 1]} : vector<8x512xf32> to vector<8x128xf32>
    %139 = arith.negf %138 : vector<8x128xf32>
    %140 = math.exp %139 : vector<8x128xf32>
    %cst_45 = arith.constant 1.000000e+00 : f32
    %141 = vector.broadcast %cst_45 : f32 to vector<8x128xf32>
    %142 = arith.addf %141, %140 : vector<8x128xf32>
    %143 = arith.divf %141, %142 : vector<8x128xf32>
    %144 = arith.mulf %135, %110 : vector<8x128xf32>
    %145 = arith.mulf %129, %137 : vector<8x128xf32>
    %146 = arith.addf %144, %145 : vector<8x128xf32>
    %147 = math.tanh %146 : vector<8x128xf32>
    %148 = arith.mulf %143, %147 : vector<8x128xf32>
    %149 = arith.index_cast %c3_i32 : i32 to index
    %c0_46 = arith.constant 0 : index
    %c0_47 = arith.constant 0 : index
    %150 = vector.load %arg5[%149, %c0_46, %c0_47] : memref<8x8x128xf32, #tpu.memory_space<vmem>>, vector<1x8x128xf32>
    %151 = vector.shape_cast %150 : vector<1x8x128xf32> to vector<8x128xf32>
    %152 = vector.shape_cast %148 : vector<8x128xf32> to vector<1x8x128xf32>
    tpu.vector_store %arg5[%149, %c0_46, %c0_47], %152 {strides = array<i32>} : memref<8x8x128xf32, #tpu.memory_space<vmem>>, vector<1x8x128xf32>,
    %c4_i32 = arith.constant 4 : i32
    %c8_i32_48 = arith.constant 8 : i32
    %153 = arith.muli %c4_i32, %c8_i32_48 : i32
    %154 = tpu.assume_multiple %153, 8 : i32
    %155 = arith.index_cast %154 : i32 to index
    %c0_49 = arith.constant 0 : index
    %156 = vector.load %arg6[%155, %c0_49] : memref<64x512xf32, #tpu.memory_space<vmem>>, vector<8x512xf32>
    %c0_50 = arith.constant 0 : index
    %c0_51 = arith.constant 0 : index
    %157 = vector.load %arg3[%c0_50, %c0_51] : memref<128x512xf32, #tpu.memory_space<vmem>>, vector<128x512xf32>
    %cst_52 = arith.constant dense<0.000000e+00> : vector<8x512xf32>
    %158 = tpu.matmul %148, %157, %cst_52 {dimension_numbers = #tpu.dot_dimension_numbers<[1], [0], [0], [1], [0, 0, 1, 1], [], []>} : vector<8x128xf32>, vector<128x512xf32>, vector<8x512xf32> -> vector<8x512xf32>
    %159 = arith.addf %156, %158 : vector<8x512xf32>
    %160 = vector.extract_strided_slice %159 {offsets = [0, 0], sizes = [8, 128], strides = [1, 1]} : vector<8x512xf32> to vector<8x128xf32>
    %161 = arith.negf %160 : vector<8x128xf32>
    %162 = math.exp %161 : vector<8x128xf32>
    %cst_53 = arith.constant 1.000000e+00 : f32
    %163 = vector.broadcast %cst_53 : f32 to vector<8x128xf32>
    %164 = arith.addf %163, %162 : vector<8x128xf32>
    %165 = arith.divf %163, %164 : vector<8x128xf32>
    %166 = vector.extract_strided_slice %159 {offsets = [0, 128], sizes = [8, 128], strides = [1, 1]} : vector<8x512xf32> to vector<8x128xf32>
    %167 = arith.negf %166 : vector<8x128xf32>
    %168 = math.exp %167 : vector<8x128xf32>
    %cst_54 = arith.constant 1.000000e+00 : f32
    %169 = vector.broadcast %cst_54 : f32 to vector<8x128xf32>
    %170 = arith.addf %169, %168 : vector<8x128xf32>
    %171 = arith.divf %169, %170 : vector<8x128xf32>
    %172 = vector.extract_strided_slice %159 {offsets = [0, 256], sizes = [8, 128], strides = [1, 1]} : vector<8x512xf32> to vector<8x128xf32>
    %173 = math.tanh %172 : vector<8x128xf32>
    %174 = vector.extract_strided_slice %159 {offsets = [0, 384], sizes = [8, 128], strides = [1, 1]} : vector<8x512xf32> to vector<8x128xf32>
    %175 = arith.negf %174 : vector<8x128xf32>
    %176 = math.exp %175 : vector<8x128xf32>
    %cst_55 = arith.constant 1.000000e+00 : f32
    %177 = vector.broadcast %cst_55 : f32 to vector<8x128xf32>
    %178 = arith.addf %177, %176 : vector<8x128xf32>
    %179 = arith.divf %177, %178 : vector<8x128xf32>
    %180 = arith.mulf %171, %146 : vector<8x128xf32>
    %181 = arith.mulf %165, %173 : vector<8x128xf32>
    %182 = arith.addf %180, %181 : vector<8x128xf32>
    %183 = math.tanh %182 : vector<8x128xf32>
    %184 = arith.mulf %179, %183 : vector<8x128xf32>
    %185 = arith.index_cast %c4_i32 : i32 to index
    %c0_56 = arith.constant 0 : index
    %c0_57 = arith.constant 0 : index
    %186 = vector.load %arg5[%185, %c0_56, %c0_57] : memref<8x8x128xf32, #tpu.memory_space<vmem>>, vector<1x8x128xf32>
    %187 = vector.shape_cast %186 : vector<1x8x128xf32> to vector<8x128xf32>
    %188 = vector.shape_cast %184 : vector<8x128xf32> to vector<1x8x128xf32>
    tpu.vector_store %arg5[%185, %c0_56, %c0_57], %188 {strides = array<i32>} : memref<8x8x128xf32, #tpu.memory_space<vmem>>, vector<1x8x128xf32>,
    %c5_i32 = arith.constant 5 : i32
    %c8_i32_58 = arith.constant 8 : i32
    %189 = arith.muli %c5_i32, %c8_i32_58 : i32
    %190 = tpu.assume_multiple %189, 8 : i32
    %191 = arith.index_cast %190 : i32 to index
    %c0_59 = arith.constant 0 : index
    %192 = vector.load %arg6[%191, %c0_59] : memref<64x512xf32, #tpu.memory_space<vmem>>, vector<8x512xf32>
    %c0_60 = arith.constant 0 : index
    %c0_61 = arith.constant 0 : index
    %193 = vector.load %arg3[%c0_60, %c0_61] : memref<128x512xf32, #tpu.memory_space<vmem>>, vector<128x512xf32>
    %cst_62 = arith.constant dense<0.000000e+00> : vector<8x512xf32>
    %194 = tpu.matmul %184, %193, %cst_62 {dimension_numbers = #tpu.dot_dimension_numbers<[1], [0], [0], [1], [0, 0, 1, 1], [], []>} : vector<8x128xf32>, vector<128x512xf32>, vector<8x512xf32> -> vector<8x512xf32>
    %195 = arith.addf %192, %194 : vector<8x512xf32>
    %196 = vector.extract_strided_slice %195 {offsets = [0, 0], sizes = [8, 128], strides = [1, 1]} : vector<8x512xf32> to vector<8x128xf32>
    %197 = arith.negf %196 : vector<8x128xf32>
    %198 = math.exp %197 : vector<8x128xf32>
    %cst_63 = arith.constant 1.000000e+00 : f32
    %199 = vector.broadcast %cst_63 : f32 to vector<8x128xf32>
    %200 = arith.addf %199, %198 : vector<8x128xf32>
    %201 = arith.divf %199, %200 : vector<8x128xf32>
    %202 = vector.extract_strided_slice %195 {offsets = [0, 128], sizes = [8, 128], strides = [1, 1]} : vector<8x512xf32> to vector<8x128xf32>
    %203 = arith.negf %202 : vector<8x128xf32>
    %204 = math.exp %203 : vector<8x128xf32>
    %cst_64 = arith.constant 1.000000e+00 : f32
    %205 = vector.broadcast %cst_64 : f32 to vector<8x128xf32>
    %206 = arith.addf %205, %204 : vector<8x128xf32>
    %207 = arith.divf %205, %206 : vector<8x128xf32>
    %208 = vector.extract_strided_slice %195 {offsets = [0, 256], sizes = [8, 128], strides = [1, 1]} : vector<8x512xf32> to vector<8x128xf32>
    %209 = math.tanh %208 : vector<8x128xf32>
    %210 = vector.extract_strided_slice %195 {offsets = [0, 384], sizes = [8, 128], strides = [1, 1]} : vector<8x512xf32> to vector<8x128xf32>
    %211 = arith.negf %210 : vector<8x128xf32>
    %212 = math.exp %211 : vector<8x128xf32>
    %cst_65 = arith.constant 1.000000e+00 : f32
    %213 = vector.broadcast %cst_65 : f32 to vector<8x128xf32>
    %214 = arith.addf %213, %212 : vector<8x128xf32>
    %215 = arith.divf %213, %214 : vector<8x128xf32>
    %216 = arith.mulf %207, %182 : vector<8x128xf32>
    %217 = arith.mulf %201, %209 : vector<8x128xf32>
    %218 = arith.addf %216, %217 : vector<8x128xf32>
    %219 = math.tanh %218 : vector<8x128xf32>
    %220 = arith.mulf %215, %219 : vector<8x128xf32>
    %221 = arith.index_cast %c5_i32 : i32 to index
    %c0_66 = arith.constant 0 : index
    %c0_67 = arith.constant 0 : index
    %222 = vector.load %arg5[%221, %c0_66, %c0_67] : memref<8x8x128xf32, #tpu.memory_space<vmem>>, vector<1x8x128xf32>
    %223 = vector.shape_cast %222 : vector<1x8x128xf32> to vector<8x128xf32>
    %224 = vector.shape_cast %220 : vector<8x128xf32> to vector<1x8x128xf32>
    tpu.vector_store %arg5[%221, %c0_66, %c0_67], %224 {strides = array<i32>} : memref<8x8x128xf32, #tpu.memory_space<vmem>>, vector<1x8x128xf32>,
    %c6_i32 = arith.constant 6 : i32
    %c8_i32_68 = arith.constant 8 : i32
    %225 = arith.muli %c6_i32, %c8_i32_68 : i32
    %226 = tpu.assume_multiple %225, 8 : i32
    %227 = arith.index_cast %226 : i32 to index
    %c0_69 = arith.constant 0 : index
    %228 = vector.load %arg6[%227, %c0_69] : memref<64x512xf32, #tpu.memory_space<vmem>>, vector<8x512xf32>
    %c0_70 = arith.constant 0 : index
    %c0_71 = arith.constant 0 : index
    %229 = vector.load %arg3[%c0_70, %c0_71] : memref<128x512xf32, #tpu.memory_space<vmem>>, vector<128x512xf32>
    %cst_72 = arith.constant dense<0.000000e+00> : vector<8x512xf32>
    %230 = tpu.matmul %220, %229, %cst_72 {dimension_numbers = #tpu.dot_dimension_numbers<[1], [0], [0], [1], [0, 0, 1, 1], [], []>} : vector<8x128xf32>, vector<128x512xf32>, vector<8x512xf32> -> vector<8x512xf32>
    %231 = arith.addf %228, %230 : vector<8x512xf32>
    %232 = vector.extract_strided_slice %231 {offsets = [0, 0], sizes = [8, 128], strides = [1, 1]} : vector<8x512xf32> to vector<8x128xf32>
    %233 = arith.negf %232 : vector<8x128xf32>
    %234 = math.exp %233 : vector<8x128xf32>
    %cst_73 = arith.constant 1.000000e+00 : f32
    %235 = vector.broadcast %cst_73 : f32 to vector<8x128xf32>
    %236 = arith.addf %235, %234 : vector<8x128xf32>
    %237 = arith.divf %235, %236 : vector<8x128xf32>
    %238 = vector.extract_strided_slice %231 {offsets = [0, 128], sizes = [8, 128], strides = [1, 1]} : vector<8x512xf32> to vector<8x128xf32>
    %239 = arith.negf %238 : vector<8x128xf32>
    %240 = math.exp %239 : vector<8x128xf32>
    %cst_74 = arith.constant 1.000000e+00 : f32
    %241 = vector.broadcast %cst_74 : f32 to vector<8x128xf32>
    %242 = arith.addf %241, %240 : vector<8x128xf32>
    %243 = arith.divf %241, %242 : vector<8x128xf32>
    %244 = vector.extract_strided_slice %231 {offsets = [0, 256], sizes = [8, 128], strides = [1, 1]} : vector<8x512xf32> to vector<8x128xf32>
    %245 = math.tanh %244 : vector<8x128xf32>
    %246 = vector.extract_strided_slice %231 {offsets = [0, 384], sizes = [8, 128], strides = [1, 1]} : vector<8x512xf32> to vector<8x128xf32>
    %247 = arith.negf %246 : vector<8x128xf32>
    %248 = math.exp %247 : vector<8x128xf32>
    %cst_75 = arith.constant 1.000000e+00 : f32
    %249 = vector.broadcast %cst_75 : f32 to vector<8x128xf32>
    %250 = arith.addf %249, %248 : vector<8x128xf32>
    %251 = arith.divf %249, %250 : vector<8x128xf32>
    %252 = arith.mulf %243, %218 : vector<8x128xf32>
    %253 = arith.mulf %237, %245 : vector<8x128xf32>
    %254 = arith.addf %252, %253 : vector<8x128xf32>
    %255 = math.tanh %254 : vector<8x128xf32>
    %256 = arith.mulf %251, %255 : vector<8x128xf32>
    %257 = arith.index_cast %c6_i32 : i32 to index
    %c0_76 = arith.constant 0 : index
    %c0_77 = arith.constant 0 : index
    %258 = vector.load %arg5[%257, %c0_76, %c0_77] : memref<8x8x128xf32, #tpu.memory_space<vmem>>, vector<1x8x128xf32>
    %259 = vector.shape_cast %258 : vector<1x8x128xf32> to vector<8x128xf32>
    %260 = vector.shape_cast %256 : vector<8x128xf32> to vector<1x8x128xf32>
    tpu.vector_store %arg5[%257, %c0_76, %c0_77], %260 {strides = array<i32>} : memref<8x8x128xf32, #tpu.memory_space<vmem>>, vector<1x8x128xf32>,
    %c7_i32 = arith.constant 7 : i32
    %c8_i32_78 = arith.constant 8 : i32
    %261 = arith.muli %c7_i32, %c8_i32_78 : i32
    %262 = tpu.assume_multiple %261, 8 : i32
    %263 = arith.index_cast %262 : i32 to index
    %c0_79 = arith.constant 0 : index
    %264 = vector.load %arg6[%263, %c0_79] : memref<64x512xf32, #tpu.memory_space<vmem>>, vector<8x512xf32>
    %c0_80 = arith.constant 0 : index
    %c0_81 = arith.constant 0 : index
    %265 = vector.load %arg3[%c0_80, %c0_81] : memref<128x512xf32, #tpu.memory_space<vmem>>, vector<128x512xf32>
    %cst_82 = arith.constant dense<0.000000e+00> : vector<8x512xf32>
    %266 = tpu.matmul %256, %265, %cst_82 {dimension_numbers = #tpu.dot_dimension_numbers<[1], [0], [0], [1], [0, 0, 1, 1], [], []>} : vector<8x128xf32>, vector<128x512xf32>, vector<8x512xf32> -> vector<8x512xf32>
    %267 = arith.addf %264, %266 : vector<8x512xf32>
    %268 = vector.extract_strided_slice %267 {offsets = [0, 0], sizes = [8, 128], strides = [1, 1]} : vector<8x512xf32> to vector<8x128xf32>
    %269 = arith.negf %268 : vector<8x128xf32>
    %270 = math.exp %269 : vector<8x128xf32>
    %cst_83 = arith.constant 1.000000e+00 : f32
    %271 = vector.broadcast %cst_83 : f32 to vector<8x128xf32>
    %272 = arith.addf %271, %270 : vector<8x128xf32>
    %273 = arith.divf %271, %272 : vector<8x128xf32>
    %274 = vector.extract_strided_slice %267 {offsets = [0, 128], sizes = [8, 128], strides = [1, 1]} : vector<8x512xf32> to vector<8x128xf32>
    %275 = arith.negf %274 : vector<8x128xf32>
    %276 = math.exp %275 : vector<8x128xf32>
    %cst_84 = arith.constant 1.000000e+00 : f32
    %277 = vector.broadcast %cst_84 : f32 to vector<8x128xf32>
    %278 = arith.addf %277, %276 : vector<8x128xf32>
    %279 = arith.divf %277, %278 : vector<8x128xf32>
    %280 = vector.extract_strided_slice %267 {offsets = [0, 256], sizes = [8, 128], strides = [1, 1]} : vector<8x512xf32> to vector<8x128xf32>
    %281 = math.tanh %280 : vector<8x128xf32>
    %282 = vector.extract_strided_slice %267 {offsets = [0, 384], sizes = [8, 128], strides = [1, 1]} : vector<8x512xf32> to vector<8x128xf32>
    %283 = arith.negf %282 : vector<8x128xf32>
    %284 = math.exp %283 : vector<8x128xf32>
    %cst_85 = arith.constant 1.000000e+00 : f32
    %285 = vector.broadcast %cst_85 : f32 to vector<8x128xf32>
    %286 = arith.addf %285, %284 : vector<8x128xf32>
    %287 = arith.divf %285, %286 : vector<8x128xf32>
    %288 = arith.mulf %279, %254 : vector<8x128xf32>
    %289 = arith.mulf %273, %281 : vector<8x128xf32>
    %290 = arith.addf %288, %289 : vector<8x128xf32>
    %291 = math.tanh %290 : vector<8x128xf32>
    %292 = arith.mulf %287, %291 : vector<8x128xf32>
    %293 = arith.index_cast %c7_i32 : i32 to index
    %c0_86 = arith.constant 0 : index
    %c0_87 = arith.constant 0 : index
    %294 = vector.load %arg5[%293, %c0_86, %c0_87] : memref<8x8x128xf32, #tpu.memory_space<vmem>>, vector<1x8x128xf32>
    %295 = vector.shape_cast %294 : vector<1x8x128xf32> to vector<8x128xf32>
    %296 = vector.shape_cast %292 : vector<8x128xf32> to vector<1x8x128xf32>
    tpu.vector_store %arg5[%293, %c0_86, %c0_87], %296 {strides = array<i32>} : memref<8x8x128xf32, #tpu.memory_space<vmem>>, vector<1x8x128xf32>,
    %c8_i32_88 = arith.constant 8 : i32
    return
  }
  func.func @transform_0(%arg0: i32) -> (i32, i32) {
    %c0_i32 = arith.constant 0 : i32
    %c0_i32_0 = arith.constant 0 : i32
    %c0_i32_1 = arith.constant 0 : i32
    return %c0_i32, %c0_i32_0 : i32, i32
  }
  func.func @transform_1(%arg0: i32) -> (i32, i32) {
    %c0_i32 = arith.constant 0 : i32
    %c0_i32_0 = arith.constant 0 : i32
    %c0_i32_1 = arith.constant 0 : i32
    return %c0_i32, %c0_i32_0 : i32, i32
  }
  func.func @transform_2(%arg0: i32) -> (i32, i32) {
    %c0_i32 = arith.constant 0 : i32
    %c0_i32_0 = arith.constant 0 : i32
    %c0_i32_1 = arith.constant 0 : i32
    return %c0_i32, %c0_i32_0 : i32, i32
  }
  func.func @transform_3(%arg0: i32) -> (i32, i32) {
    %c0_i32 = arith.constant 0 : i32
    %c0_i32_0 = arith.constant 0 : i32
    %c0_i32_1 = arith.constant 0 : i32
    return %c0_i32, %c0_i32_0 : i32, i32
  }
  func.func @transform_4(%arg0: i32) -> (i32, i32, i32) {
    %c0_i32 = arith.constant 0 : i32
    %c0_i32_0 = arith.constant 0 : i32
    %c0_i32_1 = arith.constant 0 : i32
    %c0_i32_2 = arith.constant 0 : i32
    return %c0_i32, %c0_i32_0, %c0_i32_1 : i32, i32, i32
  }
}

</mosaic_0001>

<llo_original>
// kernel: tpu_custom_call.1
$region0: #{tpu_custom_call.1}
  #allocation0 [shape = 'u32[]', space=smem, size = 0x4, offset = 0x4, fixed_abs, tag = 'smem constant byte address 0x4 - core index']
  #allocation1 [shape = 'u32[144,128]{1,0:T(1,128)}', space=vmem, size = 0x12000, scoped, tag = 'internal scratch']
  #allocation2 [shape = 'f32[64,512]{1,0:T(8,128)}', space=vmem, size = 0x20000, scoped, tag = 'scratch operand']
  %s0 = inlined_call_operand.vmem [shape: f32[64,16], index: 0, kind: input, shape index: {}]
  %s1 = inlined_call_operand.vmem [shape: f32[16,512], index: 1, kind: input, shape index: {}]
  %s2 = inlined_call_operand.hbm [shape: f32[128,512], index: 2, kind: input, shape index: {}]
  %s3 = inlined_call_operand.vmem [shape: f32[1,512], index: 3, kind: input, shape index: {}]
  %s4 = inlined_call_operand.hbm [shape: f32[8,8,128], index: 4, kind: output, shape index: {}]
  %s5 = sld [smem:[#allocation0]]
  $region30: #{tpu_custom_call.1} parent=0
    _
  %s7 = ssub.s32 1, %s5
  %s8 = scalar_select 0, %s7, %s5
  $region1: #{tpu_custom_call.1} parent=0
    #allocation3 [shape = 'u8[262144]{0}', space=vmem, size = 0x40000, scoped, tag = 'input window, operand 2, single buffered']
    #allocation4 [shape = 's32[1]{0}', space=sflag, size = 0x4, scoped, tag = 'scoped memory for tpu_custom_call.1']
    #allocation5 [shape = 's32[1]{0}', space=sflag, size = 0x4, scoped, tag = 'scoped memory for tpu_custom_call.1']
    #allocation6 [shape = 'u8[32768]{0}', space=vmem, size = 0x8000, scoped, tag = 'output window, operand 0, single buffered']
    %9 = vsyncpa [#allocation4], 0
    %10 = vsyncpa [#allocation5], 0
    // Predicated region
    $region2: #{tpu_custom_call.1} parent=1 // pred_check
      _
    $region3: #{tpu_custom_call.1} parent=1 // pred_check_branch
      %12 = sbr.rel (0) target = $region5
    $region4: #{tpu_custom_call.1} parent=1 // pred_region
      _
    $region5: #{tpu_custom_call.1} parent=1 // pred_fallthru
      _
    // Predicated region
    $region6: #{tpu_custom_call.1} parent=1 // pred_check
      _
    $region7: #{tpu_custom_call.1} parent=1 // pred_check_branch
      %14 = sbr.rel (0) target = $region9
    $region8: #{tpu_custom_call.1} parent=1 // pred_region
      _
    $region9: #{tpu_custom_call.1} parent=1 // pred_fallthru
      _
    // Predicated region
    $region10: #{tpu_custom_call.1} parent=1 // pred_check
      _
    $region11: #{tpu_custom_call.1} parent=1 // pred_check_branch
      %16 = sbr.rel (0) target = $region13
    $region12: #{tpu_custom_call.1} parent=1 // pred_region
      %s18 = ssub.s32 8192, 8192
      %19 = vsyncadd [#allocation4], %s18
      %s20 = sshll.u32 [#allocation3], 4
      %s21 = int_to_ptr.vmem [resolvable:$true] %s20
      %26 = dma.hbm_to_vmem [thread:$0]  %s2, 8192, %s21, [#allocation4], 512, 512, 32
    $region13: #{tpu_custom_call.1} parent=1 // pred_fallthru
      _
    // Predicated region
    $region14: #{tpu_custom_call.1} parent=1 // pred_check
      _
    $region15: #{tpu_custom_call.1} parent=1 // pred_check_branch
      %28 = sbr.rel (0) target = $region17
    $region16: #{tpu_custom_call.1} parent=1 // pred_region
      _
    $region17: #{tpu_custom_call.1} parent=1 // pred_fallthru
      _
    // Predicated region
    $region18: #{tpu_custom_call.1} parent=1 // pred_check
      _
    $region19: #{tpu_custom_call.1} parent=1 // pred_check_branch
      %30 = sbr.rel (0) target = $region21
    $region20: #{tpu_custom_call.1} parent=1 // pred_region
      %31 = dma.done [#allocation4], 8192
    $region21: #{tpu_custom_call.1} parent=1 // pred_fallthru
      _
    %v32 = vld [vmem:[%s0] sm:$0xff]
    %v33 = vld [vmem:[%s0 + $0x8] sm:$0xff]
    %v34 = vld [vmem:[%s0 + $0x10] sm:$0xff]
    %v35 = vld [vmem:[%s0 + $0x18] sm:$0xff]
    %v36 = vld [vmem:[%s0 + $0x20] sm:$0xff]
    %v37 = vld [vmem:[%s0 + $0x28] sm:$0xff]
    %v38 = vld [vmem:[%s0 + $0x30] sm:$0xff]
    %v39 = vld [vmem:[%s0 + $0x38] sm:$0xff]
    %v40 = vld [vmem:[%s1] sm:$0xff]
    %v41 = vld [vmem:[%s1 + $0x8] sm:$0xff]
    %v42 = vld [vmem:[%s1 + $0x10] sm:$0xff]
    %v43 = vld [vmem:[%s1 + $0x18] sm:$0xff]
    %v44 = vld [vmem:[%s1 + $0x20] sm:$0xff]
    %v45 = vld [vmem:[%s1 + $0x28] sm:$0xff]
    %v46 = vld [vmem:[%s1 + $0x30] sm:$0xff]
    %v47 = vld [vmem:[%s1 + $0x38] sm:$0xff]
    %v48 = vld [vmem:[%s3] sm:$0xf]
    %v50 = vlaneseq
    %v51 = vshrl.u32 %v50, 7
    %v52 = vsub.s32 0, %v51
    %v53 = vrot.slane %v48, %v52
    %v54 = vlaneseq
    %v55 = vshrl.u32 %v54, 7
    %v56 = vsub.s32 1, %v55
    %v57 = vrot.slane %v48, %v56
    %v58 = vlaneseq
    %v59 = vshrl.u32 %v58, 7
    %v60 = vsub.s32 2, %v59
    %v61 = vrot.slane %v48, %v60
    %v62 = vlaneseq
    %v63 = vshrl.u32 %v62, 7
    %v64 = vsub.s32 3, %v63
    %v65 = vrot.slane %v48, %v64
    %vm70 = vcmask 130048
    %v72 = vsel %vm70, %v32, 0
    %v75 = vsel %vm70, %v33, 0
    %v78 = vsel %vm70, %v34, 0
    %v81 = vsel %vm70, %v35, 0
    %v84 = vsel %vm70, %v36, 0
    %v87 = vsel %vm70, %v37, 0
    %v90 = vsel %vm70, %v38, 0
    %v93 = vsel %vm70, %v39, 0
    %95 = vmatprep.subr.mxu0 0.0
    %96 = vmatpush1.msra.mxu0 0.0
    %97 = vmatprep.subr.mxu0 0.0
    %98 = vmatpush1.msra.mxu0 0.0
    %99 = vmatprep.subr.mxu0 0.0
    %100 = vmatpush1.msra.mxu0 0.0
    %101 = vmatprep.subr.mxu0 0.0
    %102 = vmatpush1.msra.mxu0 0.0
    %103 = vmatprep.subr.mxu0 0.0
    %104 = vmatpush1.msra.mxu0 0.0
    %105 = vmatprep.subr.mxu0 0.0
    %106 = vmatpush1.msra.mxu0 0.0
    %107 = vmatprep.subr.mxu0 0.0
    %108 = vmatpush1.msra.mxu0 0.0
    %109 = vmatprep.subr.mxu0 0.0
    %110 = vmatpush1.msra.mxu0 0.0
    %111 = vmatprep.subr.mxu0 0.0
    %112 = vmatpush1.msra.mxu0 0.0
    %113 = vmatprep.subr.mxu0 0.0
    %114 = vmatpush1.msra.mxu0 0.0
    %115 = vmatprep.subr.mxu0 0.0
    %116 = vmatpush1.msra.mxu0 0.0
    %117 = vmatprep.subr.mxu0 0.0
    %118 = vmatpush1.msra.mxu0 0.0
    %119 = vmatprep.subr.mxu0 0.0
    %120 = vmatpush1.msra.mxu0 0.0
    %121 = vmatprep.subr.mxu0 0.0
    %122 = vmatpush1.msra.mxu0 0.0
    %123 = vmatprep.subr.mxu0 %v45
    %124 = vmatpush1.msra.mxu0 %v44
    %125 = vmatprep.subr.mxu0 %v41
    %126 = vmatpush1.msra.mxu0 %v40
    %127 = vmatprep.subr.mxu0 0.0
    %128 = vmatpush2.msra.mxu0 0.0
    %129 = vmatprep.subr.mxu0 0.0
    %130 = vmatpush2.msra.mxu0 0.0
    %131 = vmatprep.subr.mxu0 0.0
    %132 = vmatpush2.msra.mxu0 0.0
    %133 = vmatprep.subr.mxu0 0.0
    %134 = vmatpush2.msra.mxu0 0.0
    %135 = vmatprep.subr.mxu0 0.0
    %136 = vmatpush2.msra.mxu0 0.0
    %137 = vmatprep.subr.mxu0 0.0
    %138 = vmatpush2.msra.mxu0 0.0
    %139 = vmatprep.subr.mxu0 0.0
    %140 = vmatpush2.msra.mxu0 0.0
    %141 = vmatprep.subr.mxu0 0.0
    %142 = vmatpush2.msra.mxu0 0.0
    %143 = vmatprep.subr.mxu0 0.0
    %144 = vmatpush2.msra.mxu0 0.0
    %145 = vmatprep.subr.mxu0 0.0
    %146 = vmatpush2.msra.mxu0 0.0
    %147 = vmatprep.subr.mxu0 0.0
    %148 = vmatpush2.msra.mxu0 0.0
    %149 = vmatprep.subr.mxu0 0.0
    %150 = vmatpush2.msra.mxu0 0.0
    %151 = vmatprep.subr.mxu0 0.0
    %152 = vmatpush2.msra.mxu0 0.0
    %153 = vmatprep.subr.mxu0 0.0
    %154 = vmatpush2.msra.mxu0 0.0
    %155 = vmatprep.subr.mxu0 0.0
    %156 = vmatpush2.msra.mxu0 0.0
    %157 = vmatprep.subr.mxu0 0.0
    %158 = vmatpush2.msra.mxu0 0.0
    %159 = vmatprep.mubr.f32.mxu0 0.0
    %160 = vmatmul.mubr.f32.gmra.mxu0 %v72
    %v161 = vpop.f32.mrf.mxu0
    %v162 = vadd.f32 %v53, %v161
    %v163 = vpop.f32.mrf.mxu0
    %v164 = vadd.f32 %v57, %v163
    %165 = vmatprep.mubr.f32.mxu0 0.0
    %166 = vmatmul.mubr.f32.gmra.mxu0 %v75
    %v167 = vpop.f32.mrf.mxu0
    %v168 = vadd.f32 %v53, %v167
    %v169 = vpop.f32.mrf.mxu0
    %v170 = vadd.f32 %v57, %v169
    %171 = vmatprep.mubr.f32.mxu0 0.0
    %172 = vmatmul.mubr.f32.gmra.mxu0 %v78
    %v173 = vpop.f32.mrf.mxu0
    %v174 = vadd.f32 %v53, %v173
    %v175 = vpop.f32.mrf.mxu0
    %v176 = vadd.f32 %v57, %v175
    %177 = vmatprep.mubr.f32.mxu0 0.0
    %178 = vmatmul.mubr.f32.gmra.mxu0 %v81
    %v179 = vpop.f32.mrf.mxu0
    %v180 = vadd.f32 %v53, %v179
    %v181 = vpop.f32.mrf.mxu0
    %v182 = vadd.f32 %v57, %v181
    %183 = vmatprep.mubr.f32.mxu0 0.0
    %184 = vmatmul.mubr.f32.gmra.mxu0 %v84
    %v185 = vpop.f32.mrf.mxu0
    %v186 = vadd.f32 %v53, %v185
    %v187 = vpop.f32.mrf.mxu0
    %v188 = vadd.f32 %v57, %v187
    %189 = vmatprep.mubr.f32.mxu0 0.0
    %190 = vmatmul.mubr.f32.gmra.mxu0 %v87
    %v191 = vpop.f32.mrf.mxu0
    %v192 = vadd.f32 %v53, %v191
    %v193 = vpop.f32.mrf.mxu0
    %v194 = vadd.f32 %v57, %v193
    %195 = vmatprep.mubr.f32.mxu0 0.0
    %196 = vmatmul.mubr.f32.gmra.mxu0 %v90
    %v197 = vpop.f32.mrf.mxu0
    %v198 = vadd.f32 %v53, %v197
    %v199 = vpop.f32.mrf.mxu0
    %v200 = vadd.f32 %v57, %v199
    %201 = vmatprep.mubr.f32.mxu0 0.0
    %202 = vmatmul.mubr.f32.gmra.mxu0 %v93
    %v203 = vpop.f32.mrf.mxu0
    %v204 = vadd.f32 %v53, %v203
    %v205 = vpop.f32.mrf.mxu0
    %v206 = vadd.f32 %v57, %v205
    %207 = vdwg.mxu0
    %208 = vmatprep.subr.mxu0 0.0
    %209 = vmatpush1.msra.mxu0 0.0
    %210 = vmatprep.subr.mxu0 0.0
    %211 = vmatpush1.msra.mxu0 0.0
    %212 = vmatprep.subr.mxu0 0.0
    %213 = vmatpush1.msra.mxu0 0.0
    %214 = vmatprep.subr.mxu0 0.0
    %215 = vmatpush1.msra.mxu0 0.0
    %216 = vmatprep.subr.mxu0 0.0
    %217 = vmatpush1.msra.mxu0 0.0
    %218 = vmatprep.subr.mxu0 0.0
    %219 = vmatpush1.msra.mxu0 0.0
    %220 = vmatprep.subr.mxu0 0.0
    %221 = vmatpush1.msra.mxu0 0.0
    %222 = vmatprep.subr.mxu0 0.0
    %223 = vmatpush1.msra.mxu0 0.0
    %224 = vmatprep.subr.mxu0 0.0
    %225 = vmatpush1.msra.mxu0 0.0
    %226 = vmatprep.subr.mxu0 0.0
    %227 = vmatpush1.msra.mxu0 0.0
    %228 = vmatprep.subr.mxu0 0.0
    %229 = vmatpush1.msra.mxu0 0.0
    %230 = vmatprep.subr.mxu0 0.0
    %231 = vmatpush1.msra.mxu0 0.0
    %232 = vmatprep.subr.mxu0 0.0
    %233 = vmatpush1.msra.mxu0 0.0
    %234 = vmatprep.subr.mxu0 0.0
    %235 = vmatpush1.msra.mxu0 0.0
    %236 = vmatprep.subr.mxu0 %v47
    %237 = vmatpush1.msra.mxu0 %v46
    %238 = vmatprep.subr.mxu0 %v43
    %239 = vmatpush1.msra.mxu0 %v42
    %240 = vmatprep.subr.mxu0 0.0
    %241 = vmatpush2.msra.mxu0 0.0
    %242 = vmatprep.subr.mxu0 0.0
    %243 = vmatpush2.msra.mxu0 0.0
    %244 = vmatprep.subr.mxu0 0.0
    %245 = vmatpush2.msra.mxu0 0.0
    %246 = vmatprep.subr.mxu0 0.0
    %247 = vmatpush2.msra.mxu0 0.0
    %248 = vmatprep.subr.mxu0 0.0
    %249 = vmatpush2.msra.mxu0 0.0
    %250 = vmatprep.subr.mxu0 0.0
    %251 = vmatpush2.msra.mxu0 0.0
    %252 = vmatprep.subr.mxu0 0.0
    %253 = vmatpush2.msra.mxu0 0.0
    %254 = vmatprep.subr.mxu0 0.0
    %255 = vmatpush2.msra.mxu0 0.0
    %256 = vmatprep.subr.mxu0 0.0
    %257 = vmatpush2.msra.mxu0 0.0
    %258 = vmatprep.subr.mxu0 0.0
    %259 = vmatpush2.msra.mxu0 0.0
    %260 = vmatprep.subr.mxu0 0.0
    %261 = vmatpush2.msra.mxu0 0.0
    %262 = vmatprep.subr.mxu0 0.0
    %263 = vmatpush2.msra.mxu0 0.0
    %264 = vmatprep.subr.mxu0 0.0
    %265 = vmatpush2.msra.mxu0 0.0
    %266 = vmatprep.subr.mxu0 0.0
    %267 = vmatpush2.msra.mxu0 0.0
    %268 = vmatprep.subr.mxu0 0.0
    %269 = vmatpush2.msra.mxu0 0.0
    %270 = vmatprep.subr.mxu0 0.0
    %271 = vmatpush2.msra.mxu0 0.0
    %272 = vmatprep.mubr.f32.mxu0 0.0
    %273 = vmatmul.mubr.f32.gmra.mxu0 %v72
    %v274 = vpop.f32.mrf.mxu0
    %v275 = vadd.f32 %v61, %v274
    %v276 = vpop.f32.mrf.mxu0
    %v277 = vadd.f32 %v65, %v276
    %278 = vmatprep.mubr.f32.mxu0 0.0
    %279 = vmatmul.mubr.f32.gmra.mxu0 %v75
    %v280 = vpop.f32.mrf.mxu0
    %v281 = vadd.f32 %v61, %v280
    %v282 = vpop.f32.mrf.mxu0
    %v283 = vadd.f32 %v65, %v282
    %284 = vmatprep.mubr.f32.mxu0 0.0
    %285 = vmatmul.mubr.f32.gmra.mxu0 %v78
    %v286 = vpop.f32.mrf.mxu0
    %v287 = vadd.f32 %v61, %v286
    %v288 = vpop.f32.mrf.mxu0
    %v289 = vadd.f32 %v65, %v288
    %290 = vmatprep.mubr.f32.mxu0 0.0
    %291 = vmatmul.mubr.f32.gmra.mxu0 %v81
    %v292 = vpop.f32.mrf.mxu0
    %v293 = vadd.f32 %v61, %v292
    %v294 = vpop.f32.mrf.mxu0
    %v295 = vadd.f32 %v65, %v294
    %296 = vmatprep.mubr.f32.mxu0 0.0
    %297 = vmatmul.mubr.f32.gmra.mxu0 %v84
    %v298 = vpop.f32.mrf.mxu0
    %v299 = vadd.f32 %v61, %v298
    %v300 = vpop.f32.mrf.mxu0
    %v301 = vadd.f32 %v65, %v300
    %302 = vmatprep.mubr.f32.mxu0 0.0
    %303 = vmatmul.mubr.f32.gmra.mxu0 %v87
    %v304 = vpop.f32.mrf.mxu0
    %v305 = vadd.f32 %v61, %v304
    %v306 = vpop.f32.mrf.mxu0
    %v307 = vadd.f32 %v65, %v306
    %308 = vmatprep.mubr.f32.mxu0 0.0
    %309 = vmatmul.mubr.f32.gmra.mxu0 %v90
    %v310 = vpop.f32.mrf.mxu0
    %v311 = vadd.f32 %v61, %v310
    %v312 = vpop.f32.mrf.mxu0
    %v313 = vadd.f32 %v65, %v312
    %314 = vmatprep.mubr.f32.mxu0 0.0
    %315 = vmatmul.mubr.f32.gmra.mxu0 %v93
    %v316 = vpop.f32.mrf.mxu0
    %v317 = vadd.f32 %v61, %v316
    %v318 = vpop.f32.mrf.mxu0
    %v319 = vadd.f32 %v65, %v318
    %320 = vdwg.mxu0
    %321 = vst [vmem:[#allocation2] sm:$0xff] %v162
    %322 = vst [vmem:[#allocation2 + $0x8] sm:$0xff] %v164
    %323 = vst [vmem:[#allocation2 + $0x10] sm:$0xff] %v275
    %324 = vst [vmem:[#allocation2 + $0x18] sm:$0xff] %v277
    %325 = vst [vmem:[#allocation2 + $0x20] sm:$0xff] %v168
    %326 = vst [vmem:[#allocation2 + $0x28] sm:$0xff] %v170
    %327 = vst [vmem:[#allocation2 + $0x30] sm:$0xff] %v281
    %328 = vst [vmem:[#allocation2 + $0x38] sm:$0xff] %v283
    %329 = vst [vmem:[#allocation2 + $0x40] sm:$0xff] %v174
    %330 = vst [vmem:[#allocation2 + $0x48] sm:$0xff] %v176
    %331 = vst [vmem:[#allocation2 + $0x50] sm:$0xff] %v287
    %332 = vst [vmem:[#allocation2 + $0x58] sm:$0xff] %v289
    %333 = vst [vmem:[#allocation2 + $0x60] sm:$0xff] %v180
    %334 = vst [vmem:[#allocation2 + $0x68] sm:$0xff] %v182
    %335 = vst [vmem:[#allocation2 + $0x70] sm:$0xff] %v293
    %336 = vst [vmem:[#allocation2 + $0x78] sm:$0xff] %v295
    %337 = vst [vmem:[#allocation2 + $0x80] sm:$0xff] %v186
    %338 = vst [vmem:[#allocation2 + $0x88] sm:$0xff] %v188
    %339 = vst [vmem:[#allocation2 + $0x90] sm:$0xff] %v299
    %340 = vst [vmem:[#allocation2 + $0x98] sm:$0xff] %v301
    %341 = vst [vmem:[#allocation2 + $0xa0] sm:$0xff] %v192
    %342 = vst [vmem:[#allocation2 + $0xa8] sm:$0xff] %v194
    %343 = vst [vmem:[#allocation2 + $0xb0] sm:$0xff] %v305
    %344 = vst [vmem:[#allocation2 + $0xb8] sm:$0xff] %v307
    %345 = vst [vmem:[#allocation2 + $0xc0] sm:$0xff] %v198
    %346 = vst [vmem:[#allocation2 + $0xc8] sm:$0xff] %v200
    %347 = vst [vmem:[#allocation2 + $0xd0] sm:$0xff] %v311
    %348 = vst [vmem:[#allocation2 + $0xd8] sm:$0xff] %v313
    %349 = vst [vmem:[#allocation2 + $0xe0] sm:$0xff] %v204
    %350 = vst [vmem:[#allocation2 + $0xe8] sm:$0xff] %v206
    %351 = vst [vmem:[#allocation2 + $0xf0] sm:$0xff] %v317
    %352 = vst [vmem:[#allocation2 + $0xf8] sm:$0xff] %v319
    %s353 = smul.u32 0, 4
    %s354 = smul.addr %s353, 8
    %s355 = scalar_lea.vmem [#allocation2], %s354
    %v356 = vld [vmem:[%s355] sm:$0xff]
    %v357 = vld [vmem:[%s355 + $0x8] sm:$0xff]
    %v358 = vld [vmem:[%s355 + $0x10] sm:$0xff]
    %v359 = vld [vmem:[%s355 + $0x18] sm:$0xff]
    %v360 = vld [vmem:[#allocation3] sm:$0xff]
    %v361 = vld [vmem:[#allocation3 + $0x8] sm:$0xff]
    %v362 = vld [vmem:[#allocation3 + $0x10] sm:$0xff]
    %v363 = vld [vmem:[#allocation3 + $0x18] sm:$0xff]
    %v364 = vld [vmem:[#allocation3 + $0x20] sm:$0xff]
    %v365 = vld [vmem:[#allocation3 + $0x28] sm:$0xff]
    %v366 = vld [vmem:[#allocation3 + $0x30] sm:$0xff]
    %v367 = vld [vmem:[#allocation3 + $0x38] sm:$0xff]
    %v368 = vld [vmem:[#allocation3 + $0x40] sm:$0xff]
    %v369 = vld [vmem:[#allocation3 + $0x48] sm:$0xff]
    %v370 = vld [vmem:[#allocation3 + $0x50] sm:$0xff]
    %v371 = vld [vmem:[#allocation3 + $0x58] sm:$0xff]
    %v372 = vld [vmem:[#allocation3 + $0x60] sm:$0xff]
    %v373 = vld [vmem:[#allocation3 + $0x68] sm:$0xff]
    %v374 = vld [vmem:[#allocation3 + $0x70] sm:$0xff]
    %v375 = vld [vmem:[#allocation3 + $0x78] sm:$0xff]
    %v376 = vld [vmem:[#allocation3 + $0x80] sm:$0xff]
    %v377 = vld [vmem:[#allocation3 + $0x88] sm:$0xff]
    %v378 = vld [vmem:[#allocation3 + $0x90] sm:$0xff]
    %v379 = vld [vmem:[#allocation3 + $0x98] sm:$0xff]
    %v380 = vld [vmem:[#allocation3 + $0xa0] sm:$0xff]
    %v381 = vld [vmem:[#allocation3 + $0xa8] sm:$0xff]
    %v382 = vld [vmem:[#allocation3 + $0xb0] sm:$0xff]
    %v383 = vld [vmem:[#allocation3 + $0xb8] sm:$0xff]
    %v384 = vld [vmem:[#allocation3 + $0xc0] sm:$0xff]
    %v385 = vld [vmem:[#allocation3 + $0xc8] sm:$0xff]
    %v386 = vld [vmem:[#allocation3 + $0xd0] sm:$0xff]
    %v387 = vld [vmem:[#allocation3 + $0xd8] sm:$0xff]
    %v388 = vld [vmem:[#allocation3 + $0xe0] sm:$0xff]
    %v389 = vld [vmem:[#allocation3 + $0xe8] sm:$0xff]
    %v390 = vld [vmem:[#allocation3 + $0xf0] sm:$0xff]
    %v391 = vld [vmem:[#allocation3 + $0xf8] sm:$0xff]
    %v392 = vld [vmem:[#allocation3 + $0x100] sm:$0xff]
    %v393 = vld [vmem:[#allocation3 + $0x108] sm:$0xff]
    %v394 = vld [vmem:[#allocation3 + $0x110] sm:$0xff]
    %v395 = vld [vmem:[#allocation3 + $0x118] sm:$0xff]
    %v396 = vld [vmem:[#allocation3 + $0x120] sm:$0xff]
    %v397 = vld [vmem:[#allocation3 + $0x128] sm:$0xff]
    %v398 = vld [vmem:[#allocation3 + $0x130] sm:$0xff]
    %v399 = vld [vmem:[#allocation3 + $0x138] sm:$0xff]
    %v400 = vld [vmem:[#allocation3 + $0x140] sm:$0xff]
    %v401 = vld [vmem:[#allocation3 + $0x148] sm:$0xff]
    %v402 = vld [vmem:[#allocation3 + $0x150] sm:$0xff]
    %v403 = vld [vmem:[#allocation3 + $0x158] sm:$0xff]
    %v404 = vld [vmem:[#allocation3 + $0x160] sm:$0xff]
    %v405 = vld [vmem:[#allocation3 + $0x168] sm:$0xff]
    %v406 = vld [vmem:[#allocation3 + $0x170] sm:$0xff]
    %v407 = vld [vmem:[#allocation3 + $0x178] sm:$0xff]
    %v408 = vld [vmem:[#allocation3 + $0x180] sm:$0xff]
    %v409 = vld [vmem:[#allocation3 + $0x188] sm:$0xff]
    %v410 = vld [vmem:[#allocation3 + $0x190] sm:$0xff]
    %v411 = vld [vmem:[#allocation3 + $0x198] sm:$0xff]
    %v412 = vld [vmem:[#allocation3 + $0x1a0] sm:$0xff]
    %v413 = vld [vmem:[#allocation3 + $0x1a8] sm:$0xff]
    %v414 = vld [vmem:[#allocation3 + $0x1b0] sm:$0xff]
    %v415 = vld [vmem:[#allocation3 + $0x1b8] sm:$0xff]
    %v416 = vld [vmem:[#allocation3 + $0x1c0] sm:$0xff]
    %v417 = vld [vmem:[#allocation3 + $0x1c8] sm:$0xff]
    %v418 = vld [vmem:[#allocation3 + $0x1d0] sm:$0xff]
    %v419 = vld [vmem:[#allocation3 + $0x1d8] sm:$0xff]
    %v420 = vld [vmem:[#allocation3 + $0x1e0] sm:$0xff]
    %v421 = vld [vmem:[#allocation3 + $0x1e8] sm:$0xff]
    %v422 = vld [vmem:[#allocation3 + $0x1f0] sm:$0xff]
    %v423 = vld [vmem:[#allocation3 + $0x1f8] sm:$0xff]
    %424 = vmatprep.subr.mxu0 %v421
    %425 = vmatpush1.msra.mxu0 %v420
    %426 = vmatprep.subr.mxu0 %v417
    %427 = vmatpush1.msra.mxu0 %v416
    %428 = vmatprep.subr.mxu0 %v413
    %429 = vmatpush1.msra.mxu0 %v412
    %430 = vmatprep.subr.mxu0 %v409
    %431 = vmatpush1.msra.mxu0 %v408
    %432 = vmatprep.subr.mxu0 %v405
    %433 = vmatpush1.msra.mxu0 %v404
    %434 = vmatprep.subr.mxu0 %v401
    %435 = vmatpush1.msra.mxu0 %v400
    %436 = vmatprep.subr.mxu0 %v397
    %437 = vmatpush1.msra.mxu0 %v396
    %438 = vmatprep.subr.mxu0 %v393
    %439 = vmatpush1.msra.mxu0 %v392
    %440 = vmatprep.subr.mxu0 %v389
    %441 = vmatpush1.msra.mxu0 %v388
    %442 = vmatprep.subr.mxu0 %v385
    %443 = vmatpush1.msra.mxu0 %v384
    %444 = vmatprep.subr.mxu0 %v381
    %445 = vmatpush1.msra.mxu0 %v380
    %446 = vmatprep.subr.mxu0 %v377
    %447 = vmatpush1.msra.mxu0 %v376
    %448 = vmatprep.subr.mxu0 %v373
    %449 = vmatpush1.msra.mxu0 %v372
    %450 = vmatprep.subr.mxu0 %v369
    %451 = vmatpush1.msra.mxu0 %v368
    %452 = vmatprep.subr.mxu0 %v365
    %453 = vmatpush1.msra.mxu0 %v364
    %454 = vmatprep.subr.mxu0 %v361
    %455 = vmatpush1.msra.mxu0 %v360
    %456 = vmatprep.subr.mxu0 0.0
    %457 = vmatpush2.msra.mxu0 0.0
    %458 = vmatprep.subr.mxu0 0.0
    %459 = vmatpush2.msra.mxu0 0.0
    %460 = vmatprep.subr.mxu0 0.0
    %461 = vmatpush2.msra.mxu0 0.0
    %462 = vmatprep.subr.mxu0 0.0
    %463 = vmatpush2.msra.mxu0 0.0
    %464 = vmatprep.subr.mxu0 0.0
    %465 = vmatpush2.msra.mxu0 0.0
    %466 = vmatprep.subr.mxu0 0.0
    %467 = vmatpush2.msra.mxu0 0.0
    %468 = vmatprep.subr.mxu0 0.0
    %469 = vmatpush2.msra.mxu0 0.0
    %470 = vmatprep.subr.mxu0 0.0
    %471 = vmatpush2.msra.mxu0 0.0
    %472 = vmatprep.subr.mxu0 0.0
    %473 = vmatpush2.msra.mxu0 0.0
    %474 = vmatprep.subr.mxu0 0.0
    %475 = vmatpush2.msra.mxu0 0.0
    %476 = vmatprep.subr.mxu0 0.0
    %477 = vmatpush2.msra.mxu0 0.0
    %478 = vmatprep.subr.mxu0 0.0
    %479 = vmatpush2.msra.mxu0 0.0
    %480 = vmatprep.subr.mxu0 0.0
    %481 = vmatpush2.msra.mxu0 0.0
    %482 = vmatprep.subr.mxu0 0.0
    %483 = vmatpush2.msra.mxu0 0.0
    %484 = vmatprep.subr.mxu0 0.0
    %485 = vmatpush2.msra.mxu0 0.0
    %486 = vmatprep.subr.mxu0 0.0
    %487 = vmatpush2.msra.mxu0 0.0
    %488 = vmatprep.mubr.f32.mxu0 0.0
    %489 = vmatmul.mubr.f32.gmra.mxu0 0.0
    %v490 = vpop.f32.mrf.mxu0
    %v491 = vadd.f32 0.0, %v490
    %v492 = vpop.f32.mrf.mxu0
    %v493 = vadd.f32 0.0, %v492
    %494 = vdwg.mxu0
    %495 = vmatprep.subr.mxu0 %v423
    %496 = vmatpush1.msra.mxu0 %v422
    %497 = vmatprep.subr.mxu0 %v419
    %498 = vmatpush1.msra.mxu0 %v418
    %499 = vmatprep.subr.mxu0 %v415
    %500 = vmatpush1.msra.mxu0 %v414
    %501 = vmatprep.subr.mxu0 %v411
    %502 = vmatpush1.msra.mxu0 %v410
    %503 = vmatprep.subr.mxu0 %v407
    %504 = vmatpush1.msra.mxu0 %v406
    %505 = vmatprep.subr.mxu0 %v403
    %506 = vmatpush1.msra.mxu0 %v402
    %507 = vmatprep.subr.mxu0 %v399
    %508 = vmatpush1.msra.mxu0 %v398
    %509 = vmatprep.subr.mxu0 %v395
    %510 = vmatpush1.msra.mxu0 %v394
    %511 = vmatprep.subr.mxu0 %v391
    %512 = vmatpush1.msra.mxu0 %v390
    %513 = vmatprep.subr.mxu0 %v387
    %514 = vmatpush1.msra.mxu0 %v386
    %515 = vmatprep.subr.mxu0 %v383
    %516 = vmatpush1.msra.mxu0 %v382
    %517 = vmatprep.subr.mxu0 %v379
    %518 = vmatpush1.msra.mxu0 %v378
    %519 = vmatprep.subr.mxu0 %v375
    %520 = vmatpush1.msra.mxu0 %v374
    %521 = vmatprep.subr.mxu0 %v371
    %522 = vmatpush1.msra.mxu0 %v370
    %523 = vmatprep.subr.mxu0 %v367
    %524 = vmatpush1.msra.mxu0 %v366
    %525 = vmatprep.subr.mxu0 %v363
    %526 = vmatpush1.msra.mxu0 %v362
    %527 = vmatprep.subr.mxu0 0.0
    %528 = vmatpush2.msra.mxu0 0.0
    %529 = vmatprep.subr.mxu0 0.0
    %530 = vmatpush2.msra.mxu0 0.0
    %531 = vmatprep.subr.mxu0 0.0
    %532 = vmatpush2.msra.mxu0 0.0
    %533 = vmatprep.subr.mxu0 0.0
    %534 = vmatpush2.msra.mxu0 0.0
    %535 = vmatprep.subr.mxu0 0.0
    %536 = vmatpush2.msra.mxu0 0.0
    %537 = vmatprep.subr.mxu0 0.0
    %538 = vmatpush2.msra.mxu0 0.0
    %539 = vmatprep.subr.mxu0 0.0
    %540 = vmatpush2.msra.mxu0 0.0
    %541 = vmatprep.subr.mxu0 0.0
    %542 = vmatpush2.msra.mxu0 0.0
    %543 = vmatprep.subr.mxu0 0.0
    %544 = vmatpush2.msra.mxu0 0.0
    %545 = vmatprep.subr.mxu0 0.0
    %546 = vmatpush2.msra.mxu0 0.0
    %547 = vmatprep.subr.mxu0 0.0
    %548 = vmatpush2.msra.mxu0 0.0
    %549 = vmatprep.subr.mxu0 0.0
    %550 = vmatpush2.msra.mxu0 0.0
    %551 = vmatprep.subr.mxu0 0.0
    %552 = vmatpush2.msra.mxu0 0.0
    %553 = vmatprep.subr.mxu0 0.0
    %554 = vmatpush2.msra.mxu0 0.0
    %555 = vmatprep.subr.mxu0 0.0
    %556 = vmatpush2.msra.mxu0 0.0
    %557 = vmatprep.subr.mxu0 0.0
    %558 = vmatpush2.msra.mxu0 0.0
    %559 = vmatprep.mubr.f32.mxu0 0.0
    %560 = vmatmul.mubr.f32.gmra.mxu0 0.0
    %v561 = vpop.f32.mrf.mxu0
    %v562 = vadd.f32 0.0, %v561
    %v563 = vpop.f32.mrf.mxu0
    %v564 = vadd.f32 0.0, %v563
    %565 = vdwg.mxu0
    %v566 = vadd.f32 %v356, %v491
    %v567 = vadd.f32 %v357, %v493
    %v568 = vadd.f32 %v358, %v562
    %v569 = vadd.f32 %v359, %v564
    %v570 = vxor.u32 %v566, 2147483648
    %v571 = vmul.f32 %v570, 1.442695
    %v572 = vpow.pop %v571
    %v573 = vadd.f32 %v572, 1.0
    %v574 = vrcp.pop %v573
    %v575 = vmul.f32 1.0, %v574
    %v576 = vxor.u32 %v567, 2147483648
    %v577 = vmul.f32 %v576, 1.442695
    %v578 = vpow.pop %v577
    %v579 = vadd.f32 %v578, 1.0
    %v580 = vrcp.pop %v579
    %v581 = vmul.f32 1.0, %v580
    %v582 = vtanh.pop %v568
    %v583 = vxor.u32 %v569, 2147483648
    %v584 = vmul.f32 %v583, 1.442695
    %v585 = vpow.pop %v584
    %v586 = vadd.f32 %v585, 1.0
    %v587 = vrcp.pop %v586
    %v588 = vmul.f32 1.0, %v587
    %v589 = vmul.f32 %v581, 0.0
    %v590 = vmul.f32 %v575, %v582
    %v591 = vadd.f32 %v589, %v590
    %v592 = vtanh.pop %v591
    %v593 = vmul.f32 %v588, %v592
    %594 = vst [vmem:[#allocation6] sm:$0xff] %v593
    %s595 = smul.u32 1, 4
    %s596 = smul.addr %s595, 8
    %s597 = scalar_lea.vmem [#allocation2], %s596
    %v598 = vld [vmem:[%s597] sm:$0xff]
    %v599 = vld [vmem:[%s597 + $0x8] sm:$0xff]
    %v600 = vld [vmem:[%s597 + $0x10] sm:$0xff]
    %v601 = vld [vmem:[%s597 + $0x18] sm:$0xff]
    %v602 = vld [vmem:[#allocation3] sm:$0xff]
    %v603 = vld [vmem:[#allocation3 + $0x8] sm:$0xff]
    %v604 = vld [vmem:[#allocation3 + $0x10] sm:$0xff]
    %v605 = vld [vmem:[#allocation3 + $0x18] sm:$0xff]
    %v606 = vld [vmem:[#allocation3 + $0x20] sm:$0xff]
    %v607 = vld [vmem:[#allocation3 + $0x28] sm:$0xff]
    %v608 = vld [vmem:[#allocation3 + $0x30] sm:$0xff]
    %v609 = vld [vmem:[#allocation3 + $0x38] sm:$0xff]
    %v610 = vld [vmem:[#allocation3 + $0x40] sm:$0xff]
    %v611 = vld [vmem:[#allocation3 + $0x48] sm:$0xff]
    %v612 = vld [vmem:[#allocation3 + $0x50] sm:$0xff]
    %v613 = vld [vmem:[#allocation3 + $0x58] sm:$0xff]
    %v614 = vld [vmem:[#allocation3 + $0x60] sm:$0xff]
    %v615 = vld [vmem:[#allocation3 + $0x68] sm:$0xff]
    %v616 = vld [vmem:[#allocation3 + $0x70] sm:$0xff]
    %v617 = vld [vmem:[#allocation3 + $0x78] sm:$0xff]
    %v618 = vld [vmem:[#allocation3 + $0x80] sm:$0xff]
    %v619 = vld [vmem:[#allocation3 + $0x88] sm:$0xff]
    %v620 = vld [vmem:[#allocation3 + $0x90] sm:$0xff]
    %v621 = vld [vmem:[#allocation3 + $0x98] sm:$0xff]
    %v622 = vld [vmem:[#allocation3 + $0xa0] sm:$0xff]
    %v623 = vld [vmem:[#allocation3 + $0xa8] sm:$0xff]
    %v624 = vld [vmem:[#allocation3 + $0xb0] sm:$0xff]
    %v625 = vld [vmem:[#allocation3 + $0xb8] sm:$0xff]
    %v626 = vld [vmem:[#allocation3 + $0xc0] sm:$0xff]
    %v627 = vld [vmem:[#allocation3 + $0xc8] sm:$0xff]
    %v628 = vld [vmem:[#allocation3 + $0xd0] sm:$0xff]
    %v629 = vld [vmem:[#allocation3 + $0xd8] sm:$0xff]
    %v630 = vld [vmem:[#allocation3 + $0xe0] sm:$0xff]
    %v631 = vld [vmem:[#allocation3 + $0xe8] sm:$0xff]
    %v632 = vld [vmem:[#allocation3 + $0xf0] sm:$0xff]
    %v633 = vld [vmem:[#allocation3 + $0xf8] sm:$0xff]
    %v634 = vld [vmem:[#allocation3 + $0x100] sm:$0xff]
    %v635 = vld [vmem:[#allocation3 + $0x108] sm:$0xff]
    %v636 = vld [vmem:[#allocation3 + $0x110] sm:$0xff]
    %v637 = vld [vmem:[#allocation3 + $0x118] sm:$0xff]
    %v638 = vld [vmem:[#allocation3 + $0x120] sm:$0xff]
    %v639 = vld [vmem:[#allocation3 + $0x128] sm:$0xff]
    %v640 = vld [vmem:[#allocation3 + $0x130] sm:$0xff]
    %v641 = vld [vmem:[#allocation3 + $0x138] sm:$0xff]
    %v642 = vld [vmem:[#allocation3 + $0x140] sm:$0xff]
    %v643 = vld [vmem:[#allocation3 + $0x148] sm:$0xff]
    %v644 = vld [vmem:[#allocation3 + $0x150] sm:$0xff]
    %v645 = vld [vmem:[#allocation3 + $0x158] sm:$0xff]
    %v646 = vld [vmem:[#allocation3 + $0x160] sm:$0xff]
    %v647 = vld [vmem:[#allocation3 + $0x168] sm:$0xff]
    %v648 = vld [vmem:[#allocation3 + $0x170] sm:$0xff]
    %v649 = vld [vmem:[#allocation3 + $0x178] sm:$0xff]
    %v650 = vld [vmem:[#allocation3 + $0x180] sm:$0xff]
    %v651 = vld [vmem:[#allocation3 + $0x188] sm:$0xff]
    %v652 = vld [vmem:[#allocation3 + $0x190] sm:$0xff]
    %v653 = vld [vmem:[#allocation3 + $0x198] sm:$0xff]
    %v654 = vld [vmem:[#allocation3 + $0x1a0] sm:$0xff]
    %v655 = vld [vmem:[#allocation3 + $0x1a8] sm:$0xff]
    %v656 = vld [vmem:[#allocation3 + $0x1b0] sm:$0xff]
    %v657 = vld [vmem:[#allocation3 + $0x1b8] sm:$0xff]
    %v658 = vld [vmem:[#allocation3 + $0x1c0] sm:$0xff]
    %v659 = vld [vmem:[#allocation3 + $0x1c8] sm:$0xff]
    %v660 = vld [vmem:[#allocation3 + $0x1d0] sm:$0xff]
    %v661 = vld [vmem:[#allocation3 + $0x1d8] sm:$0xff]
    %v662 = vld [vmem:[#allocation3 + $0x1e0] sm:$0xff]
    %v663 = vld [vmem:[#allocation3 + $0x1e8] sm:$0xff]
    %v664 = vld [vmem:[#allocation3 + $0x1f0] sm:$0xff]
    %v665 = vld [vmem:[#allocation3 + $0x1f8] sm:$0xff]
    %666 = vmatprep.subr.mxu0 %v663
    %667 = vmatpush1.msra.mxu0 %v662
    %668 = vmatprep.subr.mxu0 %v659
    %669 = vmatpush1.msra.mxu0 %v658
    %670 = vmatprep.subr.mxu0 %v655
    %671 = vmatpush1.msra.mxu0 %v654
    %672 = vmatprep.subr.mxu0 %v651
    %673 = vmatpush1.msra.mxu0 %v650
    %674 = vmatprep.subr.mxu0 %v647
    %675 = vmatpush1.msra.mxu0 %v646
    %676 = vmatprep.subr.mxu0 %v643
    %677 = vmatpush1.msra.mxu0 %v642
    %678 = vmatprep.subr.mxu0 %v639
    %679 = vmatpush1.msra.mxu0 %v638
    %680 = vmatprep.subr.mxu0 %v635
    %681 = vmatpush1.msra.mxu0 %v634
    %682 = vmatprep.subr.mxu0 %v631
    %683 = vmatpush1.msra.mxu0 %v630
    %684 = vmatprep.subr.mxu0 %v627
    %685 = vmatpush1.msra.mxu0 %v626
    %686 = vmatprep.subr.mxu0 %v623
    %687 = vmatpush1.msra.mxu0 %v622
    %688 = vmatprep.subr.mxu0 %v619
    %689 = vmatpush1.msra.mxu0 %v618
    %690 = vmatprep.subr.mxu0 %v615
    %691 = vmatpush1.msra.mxu0 %v614
    %692 = vmatprep.subr.mxu0 %v611
    %693 = vmatpush1.msra.mxu0 %v610
    %694 = vmatprep.subr.mxu0 %v607
    %695 = vmatpush1.msra.mxu0 %v606
    %696 = vmatprep.subr.mxu0 %v603
    %697 = vmatpush1.msra.mxu0 %v602
    %698 = vmatprep.subr.mxu0 0.0
    %699 = vmatpush2.msra.mxu0 0.0
    %700 = vmatprep.subr.mxu0 0.0
    %701 = vmatpush2.msra.mxu0 0.0
    %702 = vmatprep.subr.mxu0 0.0
    %703 = vmatpush2.msra.mxu0 0.0
    %704 = vmatprep.subr.mxu0 0.0
    %705 = vmatpush2.msra.mxu0 0.0
    %706 = vmatprep.subr.mxu0 0.0
    %707 = vmatpush2.msra.mxu0 0.0
    %708 = vmatprep.subr.mxu0 0.0
    %709 = vmatpush2.msra.mxu0 0.0
    %710 = vmatprep.subr.mxu0 0.0
    %711 = vmatpush2.msra.mxu0 0.0
    %712 = vmatprep.subr.mxu0 0.0
    %713 = vmatpush2.msra.mxu0 0.0
    %714 = vmatprep.subr.mxu0 0.0
    %715 = vmatpush2.msra.mxu0 0.0
    %716 = vmatprep.subr.mxu0 0.0
    %717 = vmatpush2.msra.mxu0 0.0
    %718 = vmatprep.subr.mxu0 0.0
    %719 = vmatpush2.msra.mxu0 0.0
    %720 = vmatprep.subr.mxu0 0.0
    %721 = vmatpush2.msra.mxu0 0.0
    %722 = vmatprep.subr.mxu0 0.0
    %723 = vmatpush2.msra.mxu0 0.0
    %724 = vmatprep.subr.mxu0 0.0
    %725 = vmatpush2.msra.mxu0 0.0
    %726 = vmatprep.subr.mxu0 0.0
    %727 = vmatpush2.msra.mxu0 0.0
    %728 = vmatprep.subr.mxu0 0.0
    %729 = vmatpush2.msra.mxu0 0.0
    %730 = vmatprep.mubr.f32.mxu0 0.0
    %731 = vmatmul.mubr.f32.gmra.mxu0 %v593
    %v732 = vpop.f32.mrf.mxu0
    %v733 = vadd.f32 0.0, %v732
    %v734 = vpop.f32.mrf.mxu0
    %v735 = vadd.f32 0.0, %v734
    %736 = vdwg.mxu0
    %737 = vmatprep.subr.mxu0 %v665
    %738 = vmatpush1.msra.mxu0 %v664
    %739 = vmatprep.subr.mxu0 %v661
    %740 = vmatpush1.msra.mxu0 %v660
    %741 = vmatprep.subr.mxu0 %v657
    %742 = vmatpush1.msra.mxu0 %v656
    %743 = vmatprep.subr.mxu0 %v653
    %744 = vmatpush1.msra.mxu0 %v652
    %745 = vmatprep.subr.mxu0 %v649
    %746 = vmatpush1.msra.mxu0 %v648
    %747 = vmatprep.subr.mxu0 %v645
    %748 = vmatpush1.msra.mxu0 %v644
    %749 = vmatprep.subr.mxu0 %v641
    %750 = vmatpush1.msra.mxu0 %v640
    %751 = vmatprep.subr.mxu0 %v637
    %752 = vmatpush1.msra.mxu0 %v636
    %753 = vmatprep.subr.mxu0 %v633
    %754 = vmatpush1.msra.mxu0 %v632
    %755 = vmatprep.subr.mxu0 %v629
    %756 = vmatpush1.msra.mxu0 %v628
    %757 = vmatprep.subr.mxu0 %v625
    %758 = vmatpush1.msra.mxu0 %v624
    %759 = vmatprep.subr.mxu0 %v621
    %760 = vmatpush1.msra.mxu0 %v620
    %761 = vmatprep.subr.mxu0 %v617
    %762 = vmatpush1.msra.mxu0 %v616
    %763 = vmatprep.subr.mxu0 %v613
    %764 = vmatpush1.msra.mxu0 %v612
    %765 = vmatprep.subr.mxu0 %v609
    %766 = vmatpush1.msra.mxu0 %v608
    %767 = vmatprep.subr.mxu0 %v605
    %768 = vmatpush1.msra.mxu0 %v604
    %769 = vmatprep.subr.mxu0 0.0
    %770 = vmatpush2.msra.mxu0 0.0
    %771 = vmatprep.subr.mxu0 0.0
    %772 = vmatpush2.msra.mxu0 0.0
    %773 = vmatprep.subr.mxu0 0.0
    %774 = vmatpush2.msra.mxu0 0.0
    %775 = vmatprep.subr.mxu0 0.0
    %776 = vmatpush2.msra.mxu0 0.0
    %777 = vmatprep.subr.mxu0 0.0
    %778 = vmatpush2.msra.mxu0 0.0
    %779 = vmatprep.subr.mxu0 0.0
    %780 = vmatpush2.msra.mxu0 0.0
    %781 = vmatprep.subr.mxu0 0.0
    %782 = vmatpush2.msra.mxu0 0.0
    %783 = vmatprep.subr.mxu0 0.0
    %784 = vmatpush2.msra.mxu0 0.0
    %785 = vmatprep.subr.mxu0 0.0
    %786 = vmatpush2.msra.mxu0 0.0
    %787 = vmatprep.subr.mxu0 0.0
    %788 = vmatpush2.msra.mxu0 0.0
    %789 = vmatprep.subr.mxu0 0.0
    %790 = vmatpush2.msra.mxu0 0.0
    %791 = vmatprep.subr.mxu0 0.0
    %792 = vmatpush2.msra.mxu0 0.0
    %793 = vmatprep.subr.mxu0 0.0
    %794 = vmatpush2.msra.mxu0 0.0
    %795 = vmatprep.subr.mxu0 0.0
    %796 = vmatpush2.msra.mxu0 0.0
    %797 = vmatprep.subr.mxu0 0.0
    %798 = vmatpush2.msra.mxu0 0.0
    %799 = vmatprep.subr.mxu0 0.0
    %800 = vmatpush2.msra.mxu0 0.0
    %801 = vmatprep.mubr.f32.mxu0 0.0
    %802 = vmatmul.mubr.f32.gmra.mxu0 %v593
    %v803 = vpop.f32.mrf.mxu0
    %v804 = vadd.f32 0.0, %v803
    %v805 = vpop.f32.mrf.mxu0
    %v806 = vadd.f32 0.0, %v805
    %807 = vdwg.mxu0
    %v808 = vadd.f32 %v598, %v733
    %v809 = vadd.f32 %v599, %v735
    %v810 = vadd.f32 %v600, %v804
    %v811 = vadd.f32 %v601, %v806
    %v812 = vxor.u32 %v808, 2147483648
    %v813 = vmul.f32 %v812, 1.442695
    %v814 = vpow.pop %v813
    %v815 = vadd.f32 %v814, 1.0
    %v816 = vrcp.pop %v815
    %v817 = vmul.f32 1.0, %v816
    %v818 = vxor.u32 %v809, 2147483648
    %v819 = vmul.f32 %v818, 1.442695
    %v820 = vpow.pop %v819
    %v821 = vadd.f32 %v820, 1.0
    %v822 = vrcp.pop %v821
    %v823 = vmul.f32 1.0, %v822
    %v824 = vtanh.pop %v810
    %v825 = vxor.u32 %v811, 2147483648
    %v826 = vmul.f32 %v825, 1.442695
    %v827 = vpow.pop %v826
    %v828 = vadd.f32 %v827, 1.0
    %v829 = vrcp.pop %v828
    %v830 = vmul.f32 1.0, %v829
    %v831 = vmul.f32 %v823, %v591
    %v832 = vmul.f32 %v817, %v824
    %v833 = vadd.f32 %v831, %v832
    %v834 = vtanh.pop %v833
    %v835 = vmul.f32 %v830, %v834
    %s836 = scalar_lea.vmem [#allocation6], 8
    %837 = vst [vmem:[%s836] sm:$0xff] %v835
    %s838 = smul.u32 2, 4
    %s839 = smul.addr %s838, 8
    %s840 = scalar_lea.vmem [#allocation2], %s839
    %v841 = vld [vmem:[%s840] sm:$0xff]
    %v842 = vld [vmem:[%s840 + $0x8] sm:$0xff]
    %v843 = vld [vmem:[%s840 + $0x10] sm:$0xff]
    %v844 = vld [vmem:[%s840 + $0x18] sm:$0xff]
    %v845 = vld [vmem:[#allocation3] sm:$0xff]
    %v846 = vld [vmem:[#allocation3 + $0x8] sm:$0xff]
    %v847 = vld [vmem:[#allocation3 + $0x10] sm:$0xff]
    %v848 = vld [vmem:[#allocation3 + $0x18] sm:$0xff]
    %v849 = vld [vmem:[#allocation3 + $0x20] sm:$0xff]
    %v850 = vld [vmem:[#allocation3 + $0x28] sm:$0xff]
    %v851 = vld [vmem:[#allocation3 + $0x30] sm:$0xff]
    %v852 = vld [vmem:[#allocation3 + $0x38] sm:$0xff]
    %v853 = vld [vmem:[#allocation3 + $0x40] sm:$0xff]
    %v854 = vld [vmem:[#allocation3 + $0x48] sm:$0xff]
    %v855 = vld [vmem:[#allocation3 + $0x50] sm:$0xff]
    %v856 = vld [vmem:[#allocation3 + $0x58] sm:$0xff]
    %v857 = vld [vmem:[#allocation3 + $0x60] sm:$0xff]
    %v858 = vld [vmem:[#allocation3 + $0x68] sm:$0xff]
    %v859 = vld [vmem:[#allocation3 + $0x70] sm:$0xff]
    %v860 = vld [vmem:[#allocation3 + $0x78] sm:$0xff]
    %v861 = vld [vmem:[#allocation3 + $0x80] sm:$0xff]
    %v862 = vld [vmem:[#allocation3 + $0x88] sm:$0xff]
    %v863 = vld [vmem:[#allocation3 + $0x90] sm:$0xff]
    %v864 = vld [vmem:[#allocation3 + $0x98] sm:$0xff]
    %v865 = vld [vmem:[#allocation3 + $0xa0] sm:$0xff]
    %v866 = vld [vmem:[#allocation3 + $0xa8] sm:$0xff]
    %v867 = vld [vmem:[#allocation3 + $0xb0] sm:$0xff]
    %v868 = vld [vmem:[#allocation3 + $0xb8] sm:$0xff]
    %v869 = vld [vmem:[#allocation3 + $0xc0] sm:$0xff]
    %v870 = vld [vmem:[#allocation3 + $0xc8] sm:$0xff]
    %v871 = vld [vmem:[#allocation3 + $0xd0] sm:$0xff]
    %v872 = vld [vmem:[#allocation3 + $0xd8] sm:$0xff]
    %v873 = vld [vmem:[#allocation3 + $0xe0] sm:$0xff]
    %v874 = vld [vmem:[#allocation3 + $0xe8] sm:$0xff]
    %v875 = vld [vmem:[#allocation3 + $0xf0] sm:$0xff]
    %v876 = vld [vmem:[#allocation3 + $0xf8] sm:$0xff]
    %v877 = vld [vmem:[#allocation3 + $0x100] sm:$0xff]
    %v878 = vld [vmem:[#allocation3 + $0x108] sm:$0xff]
    %v879 = vld [vmem:[#allocation3 + $0x110] sm:$0xff]
    %v880 = vld [vmem:[#allocation3 + $0x118] sm:$0xff]
    %v881 = vld [vmem:[#allocation3 + $0x120] sm:$0xff]
    %v882 = vld [vmem:[#allocation3 + $0x128] sm:$0xff]
    %v883 = vld [vmem:[#allocation3 + $0x130] sm:$0xff]
    %v884 = vld [vmem:[#allocation3 + $0x138] sm:$0xff]
    %v885 = vld [vmem:[#allocation3 + $0x140] sm:$0xff]
    %v886 = vld [vmem:[#allocation3 + $0x148] sm:$0xff]
    %v887 = vld [vmem:[#allocation3 + $0x150] sm:$0xff]
    %v888 = vld [vmem:[#allocation3 + $0x158] sm:$0xff]
    %v889 = vld [vmem:[#allocation3 + $0x160] sm:$0xff]
    %v890 = vld [vmem:[#allocation3 + $0x168] sm:$0xff]
    %v891 = vld [vmem:[#allocation3 + $0x170] sm:$0xff]
    %v892 = vld [vmem:[#allocation3 + $0x178] sm:$0xff]
    %v893 = vld [vmem:[#allocation3 + $0x180] sm:$0xff]
    %v894 = vld [vmem:[#allocation3 + $0x188] sm:$0xff]
    %v895 = vld [vmem:[#allocation3 + $0x190] sm:$0xff]
    %v896 = vld [vmem:[#allocation3 + $0x198] sm:$0xff]
    %v897 = vld [vmem:[#allocation3 + $0x1a0] sm:$0xff]
    %v898 = vld [vmem:[#allocation3 + $0x1a8] sm:$0xff]
    %v899 = vld [vmem:[#allocation3 + $0x1b0] sm:$0xff]
    %v900 = vld [vmem:[#allocation3 + $0x1b8] sm:$0xff]
    %v901 = vld [vmem:[#allocation3 + $0x1c0] sm:$0xff]
    %v902 = vld [vmem:[#allocation3 + $0x1c8] sm:$0xff]
    %v903 = vld [vmem:[#allocation3 + $0x1d0] sm:$0xff]
    %v904 = vld [vmem:[#allocation3 + $0x1d8] sm:$0xff]
    %v905 = vld [vmem:[#allocation3 + $0x1e0] sm:$0xff]
    %v906 = vld [vmem:[#allocation3 + $0x1e8] sm:$0xff]
    %v907 = vld [vmem:[#allocation3 + $0x1f0] sm:$0xff]
    %v908 = vld [vmem:[#allocation3 + $0x1f8] sm:$0xff]
    %909 = vmatprep.subr.mxu0 %v906
    %910 = vmatpush1.msra.mxu0 %v905
    %911 = vmatprep.subr.mxu0 %v902
    %912 = vmatpush1.msra.mxu0 %v901
    %913 = vmatprep.subr.mxu0 %v898
    %914 = vmatpush1.msra.mxu0 %v897
    %915 = vmatprep.subr.mxu0 %v894
    %916 = vmatpush1.msra.mxu0 %v893
    %917 = vmatprep.subr.mxu0 %v890
    %918 = vmatpush1.msra.mxu0 %v889
    %919 = vmatprep.subr.mxu0 %v886
    %920 = vmatpush1.msra.mxu0 %v885
    %921 = vmatprep.subr.mxu0 %v882
    %922 = vmatpush1.msra.mxu0 %v881
    %923 = vmatprep.subr.mxu0 %v878
    %924 = vmatpush1.msra.mxu0 %v877
    %925 = vmatprep.subr.mxu0 %v874
    %926 = vmatpush1.msra.mxu0 %v873
    %927 = vmatprep.subr.mxu0 %v870
    %928 = vmatpush1.msra.mxu0 %v869
    %929 = vmatprep.subr.mxu0 %v866
    %930 = vmatpush1.msra.mxu0 %v865
    %931 = vmatprep.subr.mxu0 %v862
    %932 = vmatpush1.msra.mxu0 %v861
    %933 = vmatprep.subr.mxu0 %v858
    %934 = vmatpush1.msra.mxu0 %v857
    %935 = vmatprep.subr.mxu0 %v854
    %936 = vmatpush1.msra.mxu0 %v853
    %937 = vmatprep.subr.mxu0 %v850
    %938 = vmatpush1.msra.mxu0 %v849
    %939 = vmatprep.subr.mxu0 %v846
    %940 = vmatpush1.msra.mxu0 %v845
    %941 = vmatprep.subr.mxu0 0.0
    %942 = vmatpush2.msra.mxu0 0.0
    %943 = vmatprep.subr.mxu0 0.0
    %944 = vmatpush2.msra.mxu0 0.0
    %945 = vmatprep.subr.mxu0 0.0
    %946 = vmatpush2.msra.mxu0 0.0
    %947 = vmatprep.subr.mxu0 0.0
    %948 = vmatpush2.msra.mxu0 0.0
    %949 = vmatprep.subr.mxu0 0.0
    %950 = vmatpush2.msra.mxu0 0.0
    %951 = vmatprep.subr.mxu0 0.0
    %952 = vmatpush2.msra.mxu0 0.0
    %953 = vmatprep.subr.mxu0 0.0
    %954 = vmatpush2.msra.mxu0 0.0
    %955 = vmatprep.subr.mxu0 0.0
    %956 = vmatpush2.msra.mxu0 0.0
    %957 = vmatprep.subr.mxu0 0.0
    %958 = vmatpush2.msra.mxu0 0.0
    %959 = vmatprep.subr.mxu0 0.0
    %960 = vmatpush2.msra.mxu0 0.0
    %961 = vmatprep.subr.mxu0 0.0
    %962 = vmatpush2.msra.mxu0 0.0
    %963 = vmatprep.subr.mxu0 0.0
    %964 = vmatpush2.msra.mxu0 0.0
    %965 = vmatprep.subr.mxu0 0.0
    %966 = vmatpush2.msra.mxu0 0.0
    %967 = vmatprep.subr.mxu0 0.0
    %968 = vmatpush2.msra.mxu0 0.0
    %969 = vmatprep.subr.mxu0 0.0
    %970 = vmatpush2.msra.mxu0 0.0
    %971 = vmatprep.subr.mxu0 0.0
    %972 = vmatpush2.msra.mxu0 0.0
    %973 = vmatprep.mubr.f32.mxu0 0.0
    %974 = vmatmul.mubr.f32.gmra.mxu0 %v835
    %v975 = vpop.f32.mrf.mxu0
    %v976 = vadd.f32 0.0, %v975
    %v977 = vpop.f32.mrf.mxu0
    %v978 = vadd.f32 0.0, %v977
    %979 = vdwg.mxu0
    %980 = vmatprep.subr.mxu0 %v908
    %981 = vmatpush1.msra.mxu0 %v907
    %982 = vmatprep.subr.mxu0 %v904
    %983 = vmatpush1.msra.mxu0 %v903
    %984 = vmatprep.subr.mxu0 %v900
    %985 = vmatpush1.msra.mxu0 %v899
    %986 = vmatprep.subr.mxu0 %v896
    %987 = vmatpush1.msra.mxu0 %v895
    %988 = vmatprep.subr.mxu0 %v892
    %989 = vmatpush1.msra.mxu0 %v891
    %990 = vmatprep.subr.mxu0 %v888
    %991 = vmatpush1.msra.mxu0 %v887
    %992 = vmatprep.subr.mxu0 %v884
    %993 = vmatpush1.msra.mxu0 %v883
    %994 = vmatprep.subr.mxu0 %v880
    %995 = vmatpush1.msra.mxu0 %v879
    %996 = vmatprep.subr.mxu0 %v876
    %997 = vmatpush1.msra.mxu0 %v875
    %998 = vmatprep.subr.mxu0 %v872
    %999 = vmatpush1.msra.mxu0 %v871
    %1000 = vmatprep.subr.mxu0 %v868
    %1001 = vmatpush1.msra.mxu0 %v867
    %1002 = vmatprep.subr.mxu0 %v864
    %1003 = vmatpush1.msra.mxu0 %v863
    %1004 = vmatprep.subr.mxu0 %v860
    %1005 = vmatpush1.msra.mxu0 %v859
    %1006 = vmatprep.subr.mxu0 %v856
    %1007 = vmatpush1.msra.mxu0 %v855
    %1008 = vmatprep.subr.mxu0 %v852
    %1009 = vmatpush1.msra.mxu0 %v851
    %1010 = vmatprep.subr.mxu0 %v848
    %1011 = vmatpush1.msra.mxu0 %v847
    %1012 = vmatprep.subr.mxu0 0.0
    %1013 = vmatpush2.msra.mxu0 0.0
    %1014 = vmatprep.subr.mxu0 0.0
    %1015 = vmatpush2.msra.mxu0 0.0
    %1016 = vmatprep.subr.mxu0 0.0
    %1017 = vmatpush2.msra.mxu0 0.0
    %1018 = vmatprep.subr.mxu0 0.0
    %1019 = vmatpush2.msra.mxu0 0.0
    %1020 = vmatprep.subr.mxu0 0.0
    %1021 = vmatpush2.msra.mxu0 0.0
    %1022 = vmatprep.subr.mxu0 0.0
    %1023 = vmatpush2.msra.mxu0 0.0
    %1024 = vmatprep.subr.mxu0 0.0
    %1025 = vmatpush2.msra.mxu0 0.0
    %1026 = vmatprep.subr.mxu0 0.0
    %1027 = vmatpush2.msra.mxu0 0.0
    %1028 = vmatprep.subr.mxu0 0.0
    %1029 = vmatpush2.msra.mxu0 0.0
    %1030 = vmatprep.subr.mxu0 0.0
    %1031 = vmatpush2.msra.mxu0 0.0
    %1032 = vmatprep.subr.mxu0 0.0
    %1033 = vmatpush2.msra.mxu0 0.0
    %1034 = vmatprep.subr.mxu0 0.0
    %1035 = vmatpush2.msra.mxu0 0.0
    %1036 = vmatprep.subr.mxu0 0.0
    %1037 = vmatpush2.msra.mxu0 0.0
    %1038 = vmatprep.subr.mxu0 0.0
    %1039 = vmatpush2.msra.mxu0 0.0
    %1040 = vmatprep.subr.mxu0 0.0
    %1041 = vmatpush2.msra.mxu0 0.0
    %1042 = vmatprep.subr.mxu0 0.0
    %1043 = vmatpush2.msra.mxu0 0.0
    %1044 = vmatprep.mubr.f32.mxu0 0.0
    %1045 = vmatmul.mubr.f32.gmra.mxu0 %v835
    %v1046 = vpop.f32.mrf.mxu0
    %v1047 = vadd.f32 0.0, %v1046
    %v1048 = vpop.f32.mrf.mxu0
    %v1049 = vadd.f32 0.0, %v1048
    %1050 = vdwg.mxu0
    %v1051 = vadd.f32 %v841, %v976
    %v1052 = vadd.f32 %v842, %v978
    %v1053 = vadd.f32 %v843, %v1047
    %v1054 = vadd.f32 %v844, %v1049
    %v1055 = vxor.u32 %v1051, 2147483648
    %v1056 = vmul.f32 %v1055, 1.442695
    %v1057 = vpow.pop %v1056
    %v1058 = vadd.f32 %v1057, 1.0
    %v1059 = vrcp.pop %v1058
    %v1060 = vmul.f32 1.0, %v1059
    %v1061 = vxor.u32 %v1052, 2147483648
    %v1062 = vmul.f32 %v1061, 1.442695
    %v1063 = vpow.pop %v1062
    %v1064 = vadd.f32 %v1063, 1.0
    %v1065 = vrcp.pop %v1064
    %v1066 = vmul.f32 1.0, %v1065
    %v1067 = vtanh.pop %v1053
    %v1068 = vxor.u32 %v1054, 2147483648
    %v1069 = vmul.f32 %v1068, 1.442695
    %v1070 = vpow.pop %v1069
    %v1071 = vadd.f32 %v1070, 1.0
    %v1072 = vrcp.pop %v1071
    %v1073 = vmul.f32 1.0, %v1072
    %v1074 = vmul.f32 %v1066, %v833
    %v1075 = vmul.f32 %v1060, %v1067
    %v1076 = vadd.f32 %v1074, %v1075
    %v1077 = vtanh.pop %v1076
    %v1078 = vmul.f32 %v1073, %v1077
    %s1079 = scalar_lea.vmem [#allocation6], 16
    %1080 = vst [vmem:[%s1079] sm:$0xff] %v1078
    %s1081 = smul.u32 3, 4
    %s1082 = smul.addr %s1081, 8
    %s1083 = scalar_lea.vmem [#allocation2], %s1082
    %v1084 = vld [vmem:[%s1083] sm:$0xff]
    %v1085 = vld [vmem:[%s1083 + $0x8] sm:$0xff]
    %v1086 = vld [vmem:[%s1083 + $0x10] sm:$0xff]
    %v1087 = vld [vmem:[%s1083 + $0x18] sm:$0xff]
    %v1088 = vld [vmem:[#allocation3] sm:$0xff]
    %v1089 = vld [vmem:[#allocation3 + $0x8] sm:$0xff]
    %v1090 = vld [vmem:[#allocation3 + $0x10] sm:$0xff]
    %v1091 = vld [vmem:[#allocation3 + $0x18] sm:$0xff]
    %v1092 = vld [vmem:[#allocation3 + $0x20] sm:$0xff]
    %v1093 = vld [vmem:[#allocation3 + $0x28] sm:$0xff]
    %v1094 = vld [vmem:[#allocation3 + $0x30] sm:$0xff]
    %v1095 = vld [vmem:[#allocation3 + $0x38] sm:$0xff]
    %v1096 = vld [vmem:[#allocation3 + $0x40] sm:$0xff]
    %v1097 = vld [vmem:[#allocation3 + $0x48] sm:$0xff]
    %v1098 = vld [vmem:[#allocation3 + $0x50] sm:$0xff]
    %v1099 = vld [vmem:[#allocation3 + $0x58] sm:$0xff]
    %v1100 = vld [vmem:[#allocation3 + $0x60] sm:$0xff]
    %v1101 = vld [vmem:[#allocation3 + $0x68] sm:$0xff]
    %v1102 = vld [vmem:[#allocation3 + $0x70] sm:$0xff]
    %v1103 = vld [vmem:[#allocation3 + $0x78] sm:$0xff]
    %v1104 = vld [vmem:[#allocation3 + $0x80] sm:$0xff]
    %v1105 = vld [vmem:[#allocation3 + $0x88] sm:$0xff]
    %v1106 = vld [vmem:[#allocation3 + $0x90] sm:$0xff]
    %v1107 = vld [vmem:[#allocation3 + $0x98] sm:$0xff]
    %v1108 = vld [vmem:[#allocation3 + $0xa0] sm:$0xff]
    %v1109 = vld [vmem:[#allocation3 + $0xa8] sm:$0xff]
    %v1110 = vld [vmem:[#allocation3 + $0xb0] sm:$0xff]
    %v1111 = vld [vmem:[#allocation3 + $0xb8] sm:$0xff]
    %v1112 = vld [vmem:[#allocation3 + $0xc0] sm:$0xff]
    %v1113 = vld [vmem:[#allocation3 + $0xc8] sm:$0xff]
    %v1114 = vld [vmem:[#allocation3 + $0xd0] sm:$0xff]
    %v1115 = vld [vmem:[#allocation3 + $0xd8] sm:$0xff]
    %v1116 = vld [vmem:[#allocation3 + $0xe0] sm:$0xff]
    %v1117 = vld [vmem:[#allocation3 + $0xe8] sm:$0xff]
    %v1118 = vld [vmem:[#allocation3 + $0xf0] sm:$0xff]
    %v1119 = vld [vmem:[#allocation3 + $0xf8] sm:$0xff]
    %v1120 = vld [vmem:[#allocation3 + $0x100] sm:$0xff]
    %v1121 = vld [vmem:[#allocation3 + $0x108] sm:$0xff]
    %v1122 = vld [vmem:[#allocation3 + $0x110] sm:$0xff]
    %v1123 = vld [vmem:[#allocation3 + $0x118] sm:$0xff]
    %v1124 = vld [vmem:[#allocation3 + $0x120] sm:$0xff]
    %v1125 = vld [vmem:[#allocation3 + $0x128] sm:$0xff]
    %v1126 = vld [vmem:[#allocation3 + $0x130] sm:$0xff]
    %v1127 = vld [vmem:[#allocation3 + $0x138] sm:$0xff]
    %v1128 = vld [vmem:[#allocation3 + $0x140] sm:$0xff]
    %v1129 = vld [vmem:[#allocation3 + $0x148] sm:$0xff]
    %v1130 = vld [vmem:[#allocation3 + $0x150] sm:$0xff]
    %v1131 = vld [vmem:[#allocation3 + $0x158] sm:$0xff]
    %v1132 = vld [vmem:[#allocation3 + $0x160] sm:$0xff]
    %v1133 = vld [vmem:[#allocation3 + $0x168] sm:$0xff]
    %v1134 = vld [vmem:[#allocation3 + $0x170] sm:$0xff]
    %v1135 = vld [vmem:[#allocation3 + $0x178] sm:$0xff]
    %v1136 = vld [vmem:[#allocation3 + $0x180] sm:$0xff]
    %v1137 = vld [vmem:[#allocation3 + $0x188] sm:$0xff]
    %v1138 = vld [vmem:[#allocation3 + $0x190] sm:$0xff]
    %v1139 = vld [vmem:[#allocation3 + $0x198] sm:$0xff]
    %v1140 = vld [vmem:[#allocation3 + $0x1a0] sm:$0xff]
    %v1141 = vld [vmem:[#allocation3 + $0x1a8] sm:$0xff]
    %v1142 = vld [vmem:[#allocation3 + $0x1b0] sm:$0xff]
    %v1143 = vld [vmem:[#allocation3 + $0x1b8] sm:$0xff]
    %v1144 = vld [vmem:[#allocation3 + $0x1c0] sm:$0xff]
    %v1145 = vld [vmem:[#allocation3 + $0x1c8] sm:$0xff]
    %v1146 = vld [vmem:[#allocation3 + $0x1d0] sm:$0xff]
    %v1147 = vld [vmem:[#allocation3 + $0x1d8] sm:$0xff]
    %v1148 = vld [vmem:[#allocation3 + $0x1e0] sm:$0xff]
    %v1149 = vld [vmem:[#allocation3 + $0x1e8] sm:$0xff]
    %v1150 = vld [vmem:[#allocation3 + $0x1f0] sm:$0xff]
    %v1151 = vld [vmem:[#allocation3 + $0x1f8] sm:$0xff]
    %1152 = vmatprep.subr.mxu0 %v1149
    %1153 = vmatpush1.msra.mxu0 %v1148
    %1154 = vmatprep.subr.mxu0 %v1145
    %1155 = vmatpush1.msra.mxu0 %v1144
    %1156 = vmatprep.subr.mxu0 %v1141
    %1157 = vmatpush1.msra.mxu0 %v1140
    %1158 = vmatprep.subr.mxu0 %v1137
    %1159 = vmatpush1.msra.mxu0 %v1136
    %1160 = vmatprep.subr.mxu0 %v1133
    %1161 = vmatpush1.msra.mxu0 %v1132
    %1162 = vmatprep.subr.mxu0 %v1129
    %1163 = vmatpush1.msra.mxu0 %v1128
    %1164 = vmatprep.subr.mxu0 %v1125
    %1165 = vmatpush1.msra.mxu0 %v1124
    %1166 = vmatprep.subr.mxu0 %v1121
    %1167 = vmatpush1.msra.mxu0 %v1120
    %1168 = vmatprep.subr.mxu0 %v1117
    %1169 = vmatpush1.msra.mxu0 %v1116
    %1170 = vmatprep.subr.mxu0 %v1113
    %1171 = vmatpush1.msra.mxu0 %v1112
    %1172 = vmatprep.subr.mxu0 %v1109
    %1173 = vmatpush1.msra.mxu0 %v1108
    %1174 = vmatprep.subr.mxu0 %v1105
    %1175 = vmatpush1.msra.mxu0 %v1104
    %1176 = vmatprep.subr.mxu0 %v1101
    %1177 = vmatpush1.msra.mxu0 %v1100
    %1178 = vmatprep.subr.mxu0 %v1097
    %1179 = vmatpush1.msra.mxu0 %v1096
    %1180 = vmatprep.subr.mxu0 %v1093
    %1181 = vmatpush1.msra.mxu0 %v1092
    %1182 = vmatprep.subr.mxu0 %v1089
    %1183 = vmatpush1.msra.mxu0 %v1088
    %1184 = vmatprep.subr.mxu0 0.0
    %1185 = vmatpush2.msra.mxu0 0.0
    %1186 = vmatprep.subr.mxu0 0.0
    %1187 = vmatpush2.msra.mxu0 0.0
    %1188 = vmatprep.subr.mxu0 0.0
    %1189 = vmatpush2.msra.mxu0 0.0
    %1190 = vmatprep.subr.mxu0 0.0
    %1191 = vmatpush2.msra.mxu0 0.0
    %1192 = vmatprep.subr.mxu0 0.0
    %1193 = vmatpush2.msra.mxu0 0.0
    %1194 = vmatprep.subr.mxu0 0.0
    %1195 = vmatpush2.msra.mxu0 0.0
    %1196 = vmatprep.subr.mxu0 0.0
    %1197 = vmatpush2.msra.mxu0 0.0
    %1198 = vmatprep.subr.mxu0 0.0
    %1199 = vmatpush2.msra.mxu0 0.0
    %1200 = vmatprep.subr.mxu0 0.0
    %1201 = vmatpush2.msra.mxu0 0.0
    %1202 = vmatprep.subr.mxu0 0.0
    %1203 = vmatpush2.msra.mxu0 0.0
    %1204 = vmatprep.subr.mxu0 0.0
    %1205 = vmatpush2.msra.mxu0 0.0
    %1206 = vmatprep.subr.mxu0 0.0
    %1207 = vmatpush2.msra.mxu0 0.0
    %1208 = vmatprep.subr.mxu0 0.0
    %1209 = vmatpush2.msra.mxu0 0.0
    %1210 = vmatprep.subr.mxu0 0.0
    %1211 = vmatpush2.msra.mxu0 0.0
    %1212 = vmatprep.subr.mxu0 0.0
    %1213 = vmatpush2.msra.mxu0 0.0
    %1214 = vmatprep.subr.mxu0 0.0
    %1215 = vmatpush2.msra.mxu0 0.0
    %1216 = vmatprep.mubr.f32.mxu0 0.0
    %1217 = vmatmul.mubr.f32.gmra.mxu0 %v1078
    %v1218 = vpop.f32.mrf.mxu0
    %v1219 = vadd.f32 0.0, %v1218
    %v1220 = vpop.f32.mrf.mxu0
    %v1221 = vadd.f32 0.0, %v1220
    %1222 = vdwg.mxu0
    %1223 = vmatprep.subr.mxu0 %v1151
    %1224 = vmatpush1.msra.mxu0 %v1150
    %1225 = vmatprep.subr.mxu0 %v1147
    %1226 = vmatpush1.msra.mxu0 %v1146
    %1227 = vmatprep.subr.mxu0 %v1143
    %1228 = vmatpush1.msra.mxu0 %v1142
    %1229 = vmatprep.subr.mxu0 %v1139
    %1230 = vmatpush1.msra.mxu0 %v1138
    %1231 = vmatprep.subr.mxu0 %v1135
    %1232 = vmatpush1.msra.mxu0 %v1134
    %1233 = vmatprep.subr.mxu0 %v1131
    %1234 = vmatpush1.msra.mxu0 %v1130
    %1235 = vmatprep.subr.mxu0 %v1127
    %1236 = vmatpush1.msra.mxu0 %v1126
    %1237 = vmatprep.subr.mxu0 %v1123
    %1238 = vmatpush1.msra.mxu0 %v1122
    %1239 = vmatprep.subr.mxu0 %v1119
    %1240 = vmatpush1.msra.mxu0 %v1118
    %1241 = vmatprep.subr.mxu0 %v1115
    %1242 = vmatpush1.msra.mxu0 %v1114
    %1243 = vmatprep.subr.mxu0 %v1111
    %1244 = vmatpush1.msra.mxu0 %v1110
    %1245 = vmatprep.subr.mxu0 %v1107
    %1246 = vmatpush1.msra.mxu0 %v1106
    %1247 = vmatprep.subr.mxu0 %v1103
    %1248 = vmatpush1.msra.mxu0 %v1102
    %1249 = vmatprep.subr.mxu0 %v1099
    %1250 = vmatpush1.msra.mxu0 %v1098
    %1251 = vmatprep.subr.mxu0 %v1095
    %1252 = vmatpush1.msra.mxu0 %v1094
    %1253 = vmatprep.subr.mxu0 %v1091
    %1254 = vmatpush1.msra.mxu0 %v1090
    %1255 = vmatprep.subr.mxu0 0.0
    %1256 = vmatpush2.msra.mxu0 0.0
    %1257 = vmatprep.subr.mxu0 0.0
    %1258 = vmatpush2.msra.mxu0 0.0
    %1259 = vmatprep.subr.mxu0 0.0
    %1260 = vmatpush2.msra.mxu0 0.0
    %1261 = vmatprep.subr.mxu0 0.0
    %1262 = vmatpush2.msra.mxu0 0.0
    %1263 = vmatprep.subr.mxu0 0.0
    %1264 = vmatpush2.msra.mxu0 0.0
    %1265 = vmatprep.subr.mxu0 0.0
    %1266 = vmatpush2.msra.mxu0 0.0
    %1267 = vmatprep.subr.mxu0 0.0
    %1268 = vmatpush2.msra.mxu0 0.0
    %1269 = vmatprep.subr.mxu0 0.0
    %1270 = vmatpush2.msra.mxu0 0.0
    %1271 = vmatprep.subr.mxu0 0.0
    %1272 = vmatpush2.msra.mxu0 0.0
    %1273 = vmatprep.subr.mxu0 0.0
    %1274 = vmatpush2.msra.mxu0 0.0
    %1275 = vmatprep.subr.mxu0 0.0
    %1276 = vmatpush2.msra.mxu0 0.0
    %1277 = vmatprep.subr.mxu0 0.0
    %1278 = vmatpush2.msra.mxu0 0.0
    %1279 = vmatprep.subr.mxu0 0.0
    %1280 = vmatpush2.msra.mxu0 0.0
    %1281 = vmatprep.subr.mxu0 0.0
    %1282 = vmatpush2.msra.mxu0 0.0
    %1283 = vmatprep.subr.mxu0 0.0
    %1284 = vmatpush2.msra.mxu0 0.0
    %1285 = vmatprep.subr.mxu0 0.0
    %1286 = vmatpush2.msra.mxu0 0.0
    %1287 = vmatprep.mubr.f32.mxu0 0.0
    %1288 = vmatmul.mubr.f32.gmra.mxu0 %v1078
    %v1289 = vpop.f32.mrf.mxu0
    %v1290 = vadd.f32 0.0, %v1289
    %v1291 = vpop.f32.mrf.mxu0
    %v1292 = vadd.f32 0.0, %v1291
    %1293 = vdwg.mxu0
    %v1294 = vadd.f32 %v1084, %v1219
    %v1295 = vadd.f32 %v1085, %v1221
    %v1296 = vadd.f32 %v1086, %v1290
    %v1297 = vadd.f32 %v1087, %v1292
    %v1298 = vxor.u32 %v1294, 2147483648
    %v1299 = vmul.f32 %v1298, 1.442695
    %v1300 = vpow.pop %v1299
    %v1301 = vadd.f32 %v1300, 1.0
    %v1302 = vrcp.pop %v1301
    %v1303 = vmul.f32 1.0, %v1302
    %v1304 = vxor.u32 %v1295, 2147483648
    %v1305 = vmul.f32 %v1304, 1.442695
    %v1306 = vpow.pop %v1305
    %v1307 = vadd.f32 %v1306, 1.0
    %v1308 = vrcp.pop %v1307
    %v1309 = vmul.f32 1.0, %v1308
    %v1310 = vtanh.pop %v1296
    %v1311 = vxor.u32 %v1297, 2147483648
    %v1312 = vmul.f32 %v1311, 1.442695
    %v1313 = vpow.pop %v1312
    %v1314 = vadd.f32 %v1313, 1.0
    %v1315 = vrcp.pop %v1314
    %v1316 = vmul.f32 1.0, %v1315
    %v1317 = vmul.f32 %v1309, %v1076
    %v1318 = vmul.f32 %v1303, %v1310
    %v1319 = vadd.f32 %v1317, %v1318
    %v1320 = vtanh.pop %v1319
    %v1321 = vmul.f32 %v1316, %v1320
    %s1322 = scalar_lea.vmem [#allocation6], 24
    %1323 = vst [vmem:[%s1322] sm:$0xff] %v1321
    %s1324 = smul.u32 4, 4
    %s1325 = smul.addr %s1324, 8
    %s1326 = scalar_lea.vmem [#allocation2], %s1325
    %v1327 = vld [vmem:[%s1326] sm:$0xff]
    %v1328 = vld [vmem:[%s1326 + $0x8] sm:$0xff]
    %v1329 = vld [vmem:[%s1326 + $0x10] sm:$0xff]
    %v1330 = vld [vmem:[%s1326 + $0x18] sm:$0xff]
    %v1331 = vld [vmem:[#allocation3] sm:$0xff]
    %v1332 = vld [vmem:[#allocation3 + $0x8] sm:$0xff]
    %v1333 = vld [vmem:[#allocation3 + $0x10] sm:$0xff]
    %v1334 = vld [vmem:[#allocation3 + $0x18] sm:$0xff]
    %v1335 = vld [vmem:[#allocation3 + $0x20] sm:$0xff]
    %v1336 = vld [vmem:[#allocation3 + $0x28] sm:$0xff]
    %v1337 = vld [vmem:[#allocation3 + $0x30] sm:$0xff]
    %v1338 = vld [vmem:[#allocation3 + $0x38] sm:$0xff]
    %v1339 = vld [vmem:[#allocation3 + $0x40] sm:$0xff]
    %v1340 = vld [vmem:[#allocation3 + $0x48] sm:$0xff]
    %v1341 = vld [vmem:[#allocation3 + $0x50] sm:$0xff]
    %v1342 = vld [vmem:[#allocation3 + $0x58] sm:$0xff]
    %v1343 = vld [vmem:[#allocation3 + $0x60] sm:$0xff]
    %v1344 = vld [vmem:[#allocation3 + $0x68] sm:$0xff]
    %v1345 = vld [vmem:[#allocation3 + $0x70] sm:$0xff]
    %v1346 = vld [vmem:[#allocation3 + $0x78] sm:$0xff]
    %v1347 = vld [vmem:[#allocation3 + $0x80] sm:$0xff]
    %v1348 = vld [vmem:[#allocation3 + $0x88] sm:$0xff]
    %v1349 = vld [vmem:[#allocation3 + $0x90] sm:$0xff]
    %v1350 = vld [vmem:[#allocation3 + $0x98] sm:$0xff]
    %v1351 = vld [vmem:[#allocation3 + $0xa0] sm:$0xff]
    %v1352 = vld [vmem:[#allocation3 + $0xa8] sm:$0xff]
    %v1353 = vld [vmem:[#allocation3 + $0xb0] sm:$0xff]
    %v1354 = vld [vmem:[#allocation3 + $0xb8] sm:$0xff]
    %v1355 = vld [vmem:[#allocation3 + $0xc0] sm:$0xff]
    %v1356 = vld [vmem:[#allocation3 + $0xc8] sm:$0xff]
    %v1357 = vld [vmem:[#allocation3 + $0xd0] sm:$0xff]
    %v1358 = vld [vmem:[#allocation3 + $0xd8] sm:$0xff]
    %v1359 = vld [vmem:[#allocation3 + $0xe0] sm:$0xff]
    %v1360 = vld [vmem:[#allocation3 + $0xe8] sm:$0xff]
    %v1361 = vld [vmem:[#allocation3 + $0xf0] sm:$0xff]
    %v1362 = vld [vmem:[#allocation3 + $0xf8] sm:$0xff]
    %v1363 = vld [vmem:[#allocation3 + $0x100] sm:$0xff]
    %v1364 = vld [vmem:[#allocation3 + $0x108] sm:$0xff]
    %v1365 = vld [vmem:[#allocation3 + $0x110] sm:$0xff]
    %v1366 = vld [vmem:[#allocation3 + $0x118] sm:$0xff]
    %v1367 = vld [vmem:[#allocation3 + $0x120] sm:$0xff]
    %v1368 = vld [vmem:[#allocation3 + $0x128] sm:$0xff]
    %v1369 = vld [vmem:[#allocation3 + $0x130] sm:$0xff]
    %v1370 = vld [vmem:[#allocation3 + $0x138] sm:$0xff]
    %v1371 = vld [vmem:[#allocation3 + $0x140] sm:$0xff]
    %v1372 = vld [vmem:[#allocation3 + $0x148] sm:$0xff]
    %v1373 = vld [vmem:[#allocation3 + $0x150] sm:$0xff]
    %v1374 = vld [vmem:[#allocation3 + $0x158] sm:$0xff]
    %v1375 = vld [vmem:[#allocation3 + $0x160] sm:$0xff]
    %v1376 = vld [vmem:[#allocation3 + $0x168] sm:$0xff]
    %v1377 = vld [vmem:[#allocation3 + $0x170] sm:$0xff]
    %v1378 = vld [vmem:[#allocation3 + $0x178] sm:$0xff]
    %v1379 = vld [vmem:[#allocation3 + $0x180] sm:$0xff]
    %v1380 = vld [vmem:[#allocation3 + $0x188] sm:$0xff]
    %v1381 = vld [vmem:[#allocation3 + $0x190] sm:$0xff]
    %v1382 = vld [vmem:[#allocation3 + $0x198] sm:$0xff]
    %v1383 = vld [vmem:[#allocation3 + $0x1a0] sm:$0xff]
    %v1384 = vld [vmem:[#allocation3 + $0x1a8] sm:$0xff]
    %v1385 = vld [vmem:[#allocation3 + $0x1b0] sm:$0xff]
    %v1386 = vld [vmem:[#allocation3 + $0x1b8] sm:$0xff]
    %v1387 = vld [vmem:[#allocation3 + $0x1c0] sm:$0xff]
    %v1388 = vld [vmem:[#allocation3 + $0x1c8] sm:$0xff]
    %v1389 = vld [vmem:[#allocation3 + $0x1d0] sm:$0xff]
    %v1390 = vld [vmem:[#allocation3 + $0x1d8] sm:$0xff]
    %v1391 = vld [vmem:[#allocation3 + $0x1e0] sm:$0xff]
    %v1392 = vld [vmem:[#allocation3 + $0x1e8] sm:$0xff]
    %v1393 = vld [vmem:[#allocation3 + $0x1f0] sm:$0xff]
    %v1394 = vld [vmem:[#allocation3 + $0x1f8] sm:$0xff]
    %1395 = vmatprep.subr.mxu0 %v1392
    %1396 = vmatpush1.msra.mxu0 %v1391
    %1397 = vmatprep.subr.mxu0 %v1388
    %1398 = vmatpush1.msra.mxu0 %v1387
    %1399 = vmatprep.subr.mxu0 %v1384
    %1400 = vmatpush1.msra.mxu0 %v1383
    %1401 = vmatprep.subr.mxu0 %v1380
    %1402 = vmatpush1.msra.mxu0 %v1379
    %1403 = vmatprep.subr.mxu0 %v1376
    %1404 = vmatpush1.msra.mxu0 %v1375
    %1405 = vmatprep.subr.mxu0 %v1372
    %1406 = vmatpush1.msra.mxu0 %v1371
    %1407 = vmatprep.subr.mxu0 %v1368
    %1408 = vmatpush1.msra.mxu0 %v1367
    %1409 = vmatprep.subr.mxu0 %v1364
    %1410 = vmatpush1.msra.mxu0 %v1363
    %1411 = vmatprep.subr.mxu0 %v1360
    %1412 = vmatpush1.msra.mxu0 %v1359
    %1413 = vmatprep.subr.mxu0 %v1356
    %1414 = vmatpush1.msra.mxu0 %v1355
    %1415 = vmatprep.subr.mxu0 %v1352
    %1416 = vmatpush1.msra.mxu0 %v1351
    %1417 = vmatprep.subr.mxu0 %v1348
    %1418 = vmatpush1.msra.mxu0 %v1347
    %1419 = vmatprep.subr.mxu0 %v1344
    %1420 = vmatpush1.msra.mxu0 %v1343
    %1421 = vmatprep.subr.mxu0 %v1340
    %1422 = vmatpush1.msra.mxu0 %v1339
    %1423 = vmatprep.subr.mxu0 %v1336
    %1424 = vmatpush1.msra.mxu0 %v1335
    %1425 = vmatprep.subr.mxu0 %v1332
    %1426 = vmatpush1.msra.mxu0 %v1331
    %1427 = vmatprep.subr.mxu0 0.0
    %1428 = vmatpush2.msra.mxu0 0.0
    %1429 = vmatprep.subr.mxu0 0.0
    %1430 = vmatpush2.msra.mxu0 0.0
    %1431 = vmatprep.subr.mxu0 0.0
    %1432 = vmatpush2.msra.mxu0 0.0
    %1433 = vmatprep.subr.mxu0 0.0
    %1434 = vmatpush2.msra.mxu0 0.0
    %1435 = vmatprep.subr.mxu0 0.0
    %1436 = vmatpush2.msra.mxu0 0.0
    %1437 = vmatprep.subr.mxu0 0.0
    %1438 = vmatpush2.msra.mxu0 0.0
    %1439 = vmatprep.subr.mxu0 0.0
    %1440 = vmatpush2.msra.mxu0 0.0
    %1441 = vmatprep.subr.mxu0 0.0
    %1442 = vmatpush2.msra.mxu0 0.0
    %1443 = vmatprep.subr.mxu0 0.0
    %1444 = vmatpush2.msra.mxu0 0.0
    %1445 = vmatprep.subr.mxu0 0.0
    %1446 = vmatpush2.msra.mxu0 0.0
    %1447 = vmatprep.subr.mxu0 0.0
    %1448 = vmatpush2.msra.mxu0 0.0
    %1449 = vmatprep.subr.mxu0 0.0
    %1450 = vmatpush2.msra.mxu0 0.0
    %1451 = vmatprep.subr.mxu0 0.0
    %1452 = vmatpush2.msra.mxu0 0.0
    %1453 = vmatprep.subr.mxu0 0.0
    %1454 = vmatpush2.msra.mxu0 0.0
    %1455 = vmatprep.subr.mxu0 0.0
    %1456 = vmatpush2.msra.mxu0 0.0
    %1457 = vmatprep.subr.mxu0 0.0
    %1458 = vmatpush2.msra.mxu0 0.0
    %1459 = vmatprep.mubr.f32.mxu0 0.0
    %1460 = vmatmul.mubr.f32.gmra.mxu0 %v1321
    %v1461 = vpop.f32.mrf.mxu0
    %v1462 = vadd.f32 0.0, %v1461
    %v1463 = vpop.f32.mrf.mxu0
    %v1464 = vadd.f32 0.0, %v1463
    %1465 = vdwg.mxu0
    %1466 = vmatprep.subr.mxu0 %v1394
    %1467 = vmatpush1.msra.mxu0 %v1393
    %1468 = vmatprep.subr.mxu0 %v1390
    %1469 = vmatpush1.msra.mxu0 %v1389
    %1470 = vmatprep.subr.mxu0 %v1386
    %1471 = vmatpush1.msra.mxu0 %v1385
    %1472 = vmatprep.subr.mxu0 %v1382
    %1473 = vmatpush1.msra.mxu0 %v1381
    %1474 = vmatprep.subr.mxu0 %v1378
    %1475 = vmatpush1.msra.mxu0 %v1377
    %1476 = vmatprep.subr.mxu0 %v1374
    %1477 = vmatpush1.msra.mxu0 %v1373
    %1478 = vmatprep.subr.mxu0 %v1370
    %1479 = vmatpush1.msra.mxu0 %v1369
    %1480 = vmatprep.subr.mxu0 %v1366
    %1481 = vmatpush1.msra.mxu0 %v1365
    %1482 = vmatprep.subr.mxu0 %v1362
    %1483 = vmatpush1.msra.mxu0 %v1361
    %1484 = vmatprep.subr.mxu0 %v1358
    %1485 = vmatpush1.msra.mxu0 %v1357
    %1486 = vmatprep.subr.mxu0 %v1354
    %1487 = vmatpush1.msra.mxu0 %v1353
    %1488 = vmatprep.subr.mxu0 %v1350
    %1489 = vmatpush1.msra.mxu0 %v1349
    %1490 = vmatprep.subr.mxu0 %v1346
    %1491 = vmatpush1.msra.mxu0 %v1345
    %1492 = vmatprep.subr.mxu0 %v1342
    %1493 = vmatpush1.msra.mxu0 %v1341
    %1494 = vmatprep.subr.mxu0 %v1338
    %1495 = vmatpush1.msra.mxu0 %v1337
    %1496 = vmatprep.subr.mxu0 %v1334
    %1497 = vmatpush1.msra.mxu0 %v1333
    %1498 = vmatprep.subr.mxu0 0.0
    %1499 = vmatpush2.msra.mxu0 0.0
    %1500 = vmatprep.subr.mxu0 0.0
    %1501 = vmatpush2.msra.mxu0 0.0
    %1502 = vmatprep.subr.mxu0 0.0
    %1503 = vmatpush2.msra.mxu0 0.0
    %1504 = vmatprep.subr.mxu0 0.0
    %1505 = vmatpush2.msra.mxu0 0.0
    %1506 = vmatprep.subr.mxu0 0.0
    %1507 = vmatpush2.msra.mxu0 0.0
    %1508 = vmatprep.subr.mxu0 0.0
    %1509 = vmatpush2.msra.mxu0 0.0
    %1510 = vmatprep.subr.mxu0 0.0
    %1511 = vmatpush2.msra.mxu0 0.0
    %1512 = vmatprep.subr.mxu0 0.0
    %1513 = vmatpush2.msra.mxu0 0.0
    %1514 = vmatprep.subr.mxu0 0.0
    %1515 = vmatpush2.msra.mxu0 0.0
    %1516 = vmatprep.subr.mxu0 0.0
    %1517 = vmatpush2.msra.mxu0 0.0
    %1518 = vmatprep.subr.mxu0 0.0
    %1519 = vmatpush2.msra.mxu0 0.0
    %1520 = vmatprep.subr.mxu0 0.0
    %1521 = vmatpush2.msra.mxu0 0.0
    %1522 = vmatprep.subr.mxu0 0.0
    %1523 = vmatpush2.msra.mxu0 0.0
    %1524 = vmatprep.subr.mxu0 0.0
    %1525 = vmatpush2.msra.mxu0 0.0
    %1526 = vmatprep.subr.mxu0 0.0
    %1527 = vmatpush2.msra.mxu0 0.0
    %1528 = vmatprep.subr.mxu0 0.0
    %1529 = vmatpush2.msra.mxu0 0.0
    %1530 = vmatprep.mubr.f32.mxu0 0.0
    %1531 = vmatmul.mubr.f32.gmra.mxu0 %v1321
    %v1532 = vpop.f32.mrf.mxu0
    %v1533 = vadd.f32 0.0, %v1532
    %v1534 = vpop.f32.mrf.mxu0
    %v1535 = vadd.f32 0.0, %v1534
    %1536 = vdwg.mxu0
    %v1537 = vadd.f32 %v1327, %v1462
    %v1538 = vadd.f32 %v1328, %v1464
    %v1539 = vadd.f32 %v1329, %v1533
    %v1540 = vadd.f32 %v1330, %v1535
    %v1541 = vxor.u32 %v1537, 2147483648
    %v1542 = vmul.f32 %v1541, 1.442695
    %v1543 = vpow.pop %v1542
    %v1544 = vadd.f32 %v1543, 1.0
    %v1545 = vrcp.pop %v1544
    %v1546 = vmul.f32 1.0, %v1545
    %v1547 = vxor.u32 %v1538, 2147483648
    %v1548 = vmul.f32 %v1547, 1.442695
    %v1549 = vpow.pop %v1548
    %v1550 = vadd.f32 %v1549, 1.0
    %v1551 = vrcp.pop %v1550
    %v1552 = vmul.f32 1.0, %v1551
    %v1553 = vtanh.pop %v1539
    %v1554 = vxor.u32 %v1540, 2147483648
    %v1555 = vmul.f32 %v1554, 1.442695
    %v1556 = vpow.pop %v1555
    %v1557 = vadd.f32 %v1556, 1.0
    %v1558 = vrcp.pop %v1557
    %v1559 = vmul.f32 1.0, %v1558
    %v1560 = vmul.f32 %v1552, %v1319
    %v1561 = vmul.f32 %v1546, %v1553
    %v1562 = vadd.f32 %v1560, %v1561
    %v1563 = vtanh.pop %v1562
    %v1564 = vmul.f32 %v1559, %v1563
    %s1565 = scalar_lea.vmem [#allocation6], 32
    %1566 = vst [vmem:[%s1565] sm:$0xff] %v1564
    %s1567 = smul.u32 5, 4
    %s1568 = smul.addr %s1567, 8
    %s1569 = scalar_lea.vmem [#allocation2], %s1568
    %v1570 = vld [vmem:[%s1569] sm:$0xff]
    %v1571 = vld [vmem:[%s1569 + $0x8] sm:$0xff]
    %v1572 = vld [vmem:[%s1569 + $0x10] sm:$0xff]
    %v1573 = vld [vmem:[%s1569 + $0x18] sm:$0xff]
    %v1574 = vld [vmem:[#allocation3] sm:$0xff]
    %v1575 = vld [vmem:[#allocation3 + $0x8] sm:$0xff]
    %v1576 = vld [vmem:[#allocation3 + $0x10] sm:$0xff]
    %v1577 = vld [vmem:[#allocation3 + $0x18] sm:$0xff]
    %v1578 = vld [vmem:[#allocation3 + $0x20] sm:$0xff]
    %v1579 = vld [vmem:[#allocation3 + $0x28] sm:$0xff]
    %v1580 = vld [vmem:[#allocation3 + $0x30] sm:$0xff]
    %v1581 = vld [vmem:[#allocation3 + $0x38] sm:$0xff]
    %v1582 = vld [vmem:[#allocation3 + $0x40] sm:$0xff]
    %v1583 = vld [vmem:[#allocation3 + $0x48] sm:$0xff]
    %v1584 = vld [vmem:[#allocation3 + $0x50] sm:$0xff]
    %v1585 = vld [vmem:[#allocation3 + $0x58] sm:$0xff]
    %v1586 = vld [vmem:[#allocation3 + $0x60] sm:$0xff]
    %v1587 = vld [vmem:[#allocation3 + $0x68] sm:$0xff]
    %v1588 = vld [vmem:[#allocation3 + $0x70] sm:$0xff]
    %v1589 = vld [vmem:[#allocation3 + $0x78] sm:$0xff]
    %v1590 = vld [vmem:[#allocation3 + $0x80] sm:$0xff]
    %v1591 = vld [vmem:[#allocation3 + $0x88] sm:$0xff]
    %v1592 = vld [vmem:[#allocation3 + $0x90] sm:$0xff]
    %v1593 = vld [vmem:[#allocation3 + $0x98] sm:$0xff]
    %v1594 = vld [vmem:[#allocation3 + $0xa0] sm:$0xff]
    %v1595 = vld [vmem:[#allocation3 + $0xa8] sm:$0xff]
    %v1596 = vld [vmem:[#allocation3 + $0xb0] sm:$0xff]
    %v1597 = vld [vmem:[#allocation3 + $0xb8] sm:$0xff]
    %v1598 = vld [vmem:[#allocation3 + $0xc0] sm:$0xff]
    %v1599 = vld [vmem:[#allocation3 + $0xc8] sm:$0xff]
    %v1600 = vld [vmem:[#allocation3 + $0xd0] sm:$0xff]
    %v1601 = vld [vmem:[#allocation3 + $0xd8] sm:$0xff]
    %v1602 = vld [vmem:[#allocation3 + $0xe0] sm:$0xff]
    %v1603 = vld [vmem:[#allocation3 + $0xe8] sm:$0xff]
    %v1604 = vld [vmem:[#allocation3 + $0xf0] sm:$0xff]
    %v1605 = vld [vmem:[#allocation3 + $0xf8] sm:$0xff]
    %v1606 = vld [vmem:[#allocation3 + $0x100] sm:$0xff]
    %v1607 = vld [vmem:[#allocation3 + $0x108] sm:$0xff]
    %v1608 = vld [vmem:[#allocation3 + $0x110] sm:$0xff]
    %v1609 = vld [vmem:[#allocation3 + $0x118] sm:$0xff]
    %v1610 = vld [vmem:[#allocation3 + $0x120] sm:$0xff]
    %v1611 = vld [vmem:[#allocation3 + $0x128] sm:$0xff]
    %v1612 = vld [vmem:[#allocation3 + $0x130] sm:$0xff]
    %v1613 = vld [vmem:[#allocation3 + $0x138] sm:$0xff]
    %v1614 = vld [vmem:[#allocation3 + $0x140] sm:$0xff]
    %v1615 = vld [vmem:[#allocation3 + $0x148] sm:$0xff]
    %v1616 = vld [vmem:[#allocation3 + $0x150] sm:$0xff]
    %v1617 = vld [vmem:[#allocation3 + $0x158] sm:$0xff]
    %v1618 = vld [vmem:[#allocation3 + $0x160] sm:$0xff]
    %v1619 = vld [vmem:[#allocation3 + $0x168] sm:$0xff]
    %v1620 = vld [vmem:[#allocation3 + $0x170] sm:$0xff]
    %v1621 = vld [vmem:[#allocation3 + $0x178] sm:$0xff]
    %v1622 = vld [vmem:[#allocation3 + $0x180] sm:$0xff]
    %v1623 = vld [vmem:[#allocation3 + $0x188] sm:$0xff]
    %v1624 = vld [vmem:[#allocation3 + $0x190] sm:$0xff]
    %v1625 = vld [vmem:[#allocation3 + $0x198] sm:$0xff]
    %v1626 = vld [vmem:[#allocation3 + $0x1a0] sm:$0xff]
    %v1627 = vld [vmem:[#allocation3 + $0x1a8] sm:$0xff]
    %v1628 = vld [vmem:[#allocation3 + $0x1b0] sm:$0xff]
    %v1629 = vld [vmem:[#allocation3 + $0x1b8] sm:$0xff]
    %v1630 = vld [vmem:[#allocation3 + $0x1c0] sm:$0xff]
    %v1631 = vld [vmem:[#allocation3 + $0x1c8] sm:$0xff]
    %v1632 = vld [vmem:[#allocation3 + $0x1d0] sm:$0xff]
    %v1633 = vld [vmem:[#allocation3 + $0x1d8] sm:$0xff]
    %v1634 = vld [vmem:[#allocation3 + $0x1e0] sm:$0xff]
    %v1635 = vld [vmem:[#allocation3 + $0x1e8] sm:$0xff]
    %v1636 = vld [vmem:[#allocation3 + $0x1f0] sm:$0xff]
    %v1637 = vld [vmem:[#allocation3 + $0x1f8] sm:$0xff]
    %1638 = vmatprep.subr.mxu0 %v1635
    %1639 = vmatpush1.msra.mxu0 %v1634
    %1640 = vmatprep.subr.mxu0 %v1631
    %1641 = vmatpush1.msra.mxu0 %v1630
    %1642 = vmatprep.subr.mxu0 %v1627
    %1643 = vmatpush1.msra.mxu0 %v1626
    %1644 = vmatprep.subr.mxu0 %v1623
    %1645 = vmatpush1.msra.mxu0 %v1622
    %1646 = vmatprep.subr.mxu0 %v1619
    %1647 = vmatpush1.msra.mxu0 %v1618
    %1648 = vmatprep.subr.mxu0 %v1615
    %1649 = vmatpush1.msra.mxu0 %v1614
    %1650 = vmatprep.subr.mxu0 %v1611
    %1651 = vmatpush1.msra.mxu0 %v1610
    %1652 = vmatprep.subr.mxu0 %v1607
    %1653 = vmatpush1.msra.mxu0 %v1606
    %1654 = vmatprep.subr.mxu0 %v1603
    %1655 = vmatpush1.msra.mxu0 %v1602
    %1656 = vmatprep.subr.mxu0 %v1599
    %1657 = vmatpush1.msra.mxu0 %v1598
    %1658 = vmatprep.subr.mxu0 %v1595
    %1659 = vmatpush1.msra.mxu0 %v1594
    %1660 = vmatprep.subr.mxu0 %v1591
    %1661 = vmatpush1.msra.mxu0 %v1590
    %1662 = vmatprep.subr.mxu0 %v1587
    %1663 = vmatpush1.msra.mxu0 %v1586
    %1664 = vmatprep.subr.mxu0 %v1583
    %1665 = vmatpush1.msra.mxu0 %v1582
    %1666 = vmatprep.subr.mxu0 %v1579
    %1667 = vmatpush1.msra.mxu0 %v1578
    %1668 = vmatprep.subr.mxu0 %v1575
    %1669 = vmatpush1.msra.mxu0 %v1574
    %1670 = vmatprep.subr.mxu0 0.0
    %1671 = vmatpush2.msra.mxu0 0.0
    %1672 = vmatprep.subr.mxu0 0.0
    %1673 = vmatpush2.msra.mxu0 0.0
    %1674 = vmatprep.subr.mxu0 0.0
    %1675 = vmatpush2.msra.mxu0 0.0
    %1676 = vmatprep.subr.mxu0 0.0
    %1677 = vmatpush2.msra.mxu0 0.0
    %1678 = vmatprep.subr.mxu0 0.0
    %1679 = vmatpush2.msra.mxu0 0.0
    %1680 = vmatprep.subr.mxu0 0.0
    %1681 = vmatpush2.msra.mxu0 0.0
    %1682 = vmatprep.subr.mxu0 0.0
    %1683 = vmatpush2.msra.mxu0 0.0
    %1684 = vmatprep.subr.mxu0 0.0
    %1685 = vmatpush2.msra.mxu0 0.0
    %1686 = vmatprep.subr.mxu0 0.0
    %1687 = vmatpush2.msra.mxu0 0.0
    %1688 = vmatprep.subr.mxu0 0.0
    %1689 = vmatpush2.msra.mxu0 0.0
    %1690 = vmatprep.subr.mxu0 0.0
    %1691 = vmatpush2.msra.mxu0 0.0
    %1692 = vmatprep.subr.mxu0 0.0
    %1693 = vmatpush2.msra.mxu0 0.0
    %1694 = vmatprep.subr.mxu0 0.0
    %1695 = vmatpush2.msra.mxu0 0.0
    %1696 = vmatprep.subr.mxu0 0.0
    %1697 = vmatpush2.msra.mxu0 0.0
    %1698 = vmatprep.subr.mxu0 0.0
    %1699 = vmatpush2.msra.mxu0 0.0
    %1700 = vmatprep.subr.mxu0 0.0
    %1701 = vmatpush2.msra.mxu0 0.0
    %1702 = vmatprep.mubr.f32.mxu0 0.0
    %1703 = vmatmul.mubr.f32.gmra.mxu0 %v1564
    %v1704 = vpop.f32.mrf.mxu0
    %v1705 = vadd.f32 0.0, %v1704
    %v1706 = vpop.f32.mrf.mxu0
    %v1707 = vadd.f32 0.0, %v1706
    %1708 = vdwg.mxu0
    %1709 = vmatprep.subr.mxu0 %v1637
    %1710 = vmatpush1.msra.mxu0 %v1636
    %1711 = vmatprep.subr.mxu0 %v1633
    %1712 = vmatpush1.msra.mxu0 %v1632
    %1713 = vmatprep.subr.mxu0 %v1629
    %1714 = vmatpush1.msra.mxu0 %v1628
    %1715 = vmatprep.subr.mxu0 %v1625
    %1716 = vmatpush1.msra.mxu0 %v1624
    %1717 = vmatprep.subr.mxu0 %v1621
    %1718 = vmatpush1.msra.mxu0 %v1620
    %1719 = vmatprep.subr.mxu0 %v1617
    %1720 = vmatpush1.msra.mxu0 %v1616
    %1721 = vmatprep.subr.mxu0 %v1613
    %1722 = vmatpush1.msra.mxu0 %v1612
    %1723 = vmatprep.subr.mxu0 %v1609
    %1724 = vmatpush1.msra.mxu0 %v1608
    %1725 = vmatprep.subr.mxu0 %v1605
    %1726 = vmatpush1.msra.mxu0 %v1604
    %1727 = vmatprep.subr.mxu0 %v1601
    %1728 = vmatpush1.msra.mxu0 %v1600
    %1729 = vmatprep.subr.mxu0 %v1597
    %1730 = vmatpush1.msra.mxu0 %v1596
    %1731 = vmatprep.subr.mxu0 %v1593
    %1732 = vmatpush1.msra.mxu0 %v1592
    %1733 = vmatprep.subr.mxu0 %v1589
    %1734 = vmatpush1.msra.mxu0 %v1588
    %1735 = vmatprep.subr.mxu0 %v1585
    %1736 = vmatpush1.msra.mxu0 %v1584
    %1737 = vmatprep.subr.mxu0 %v1581
    %1738 = vmatpush1.msra.mxu0 %v1580
    %1739 = vmatprep.subr.mxu0 %v1577
    %1740 = vmatpush1.msra.mxu0 %v1576
    %1741 = vmatprep.subr.mxu0 0.0
    %1742 = vmatpush2.msra.mxu0 0.0
    %1743 = vmatprep.subr.mxu0 0.0
    %1744 = vmatpush2.msra.mxu0 0.0
    %1745 = vmatprep.subr.mxu0 0.0
    %1746 = vmatpush2.msra.mxu0 0.0
    %1747 = vmatprep.subr.mxu0 0.0
    %1748 = vmatpush2.msra.mxu0 0.0
    %1749 = vmatprep.subr.mxu0 0.0
    %1750 = vmatpush2.msra.mxu0 0.0
    %1751 = vmatprep.subr.mxu0 0.0
    %1752 = vmatpush2.msra.mxu0 0.0
    %1753 = vmatprep.subr.mxu0 0.0
    %1754 = vmatpush2.msra.mxu0 0.0
    %1755 = vmatprep.subr.mxu0 0.0
    %1756 = vmatpush2.msra.mxu0 0.0
    %1757 = vmatprep.subr.mxu0 0.0
    %1758 = vmatpush2.msra.mxu0 0.0
    %1759 = vmatprep.subr.mxu0 0.0
    %1760 = vmatpush2.msra.mxu0 0.0
    %1761 = vmatprep.subr.mxu0 0.0
    %1762 = vmatpush2.msra.mxu0 0.0
    %1763 = vmatprep.subr.mxu0 0.0
    %1764 = vmatpush2.msra.mxu0 0.0
    %1765 = vmatprep.subr.mxu0 0.0
    %1766 = vmatpush2.msra.mxu0 0.0
    %1767 = vmatprep.subr.mxu0 0.0
    %1768 = vmatpush2.msra.mxu0 0.0
    %1769 = vmatprep.subr.mxu0 0.0
    %1770 = vmatpush2.msra.mxu0 0.0
    %1771 = vmatprep.subr.mxu0 0.0
    %1772 = vmatpush2.msra.mxu0 0.0
    %1773 = vmatprep.mubr.f32.mxu0 0.0
    %1774 = vmatmul.mubr.f32.gmra.mxu0 %v1564
    %v1775 = vpop.f32.mrf.mxu0
    %v1776 = vadd.f32 0.0, %v1775
    %v1777 = vpop.f32.mrf.mxu0
    %v1778 = vadd.f32 0.0, %v1777
    %1779 = vdwg.mxu0
    %v1780 = vadd.f32 %v1570, %v1705
    %v1781 = vadd.f32 %v1571, %v1707
    %v1782 = vadd.f32 %v1572, %v1776
    %v1783 = vadd.f32 %v1573, %v1778
    %v1784 = vxor.u32 %v1780, 2147483648
    %v1785 = vmul.f32 %v1784, 1.442695
    %v1786 = vpow.pop %v1785
    %v1787 = vadd.f32 %v1786, 1.0
    %v1788 = vrcp.pop %v1787
    %v1789 = vmul.f32 1.0, %v1788
    %v1790 = vxor.u32 %v1781, 2147483648
    %v1791 = vmul.f32 %v1790, 1.442695
    %v1792 = vpow.pop %v1791
    %v1793 = vadd.f32 %v1792, 1.0
    %v1794 = vrcp.pop %v1793
    %v1795 = vmul.f32 1.0, %v1794
    %v1796 = vtanh.pop %v1782
    %v1797 = vxor.u32 %v1783, 2147483648
    %v1798 = vmul.f32 %v1797, 1.442695
    %v1799 = vpow.pop %v1798
    %v1800 = vadd.f32 %v1799, 1.0
    %v1801 = vrcp.pop %v1800
    %v1802 = vmul.f32 1.0, %v1801
    %v1803 = vmul.f32 %v1795, %v1562
    %v1804 = vmul.f32 %v1789, %v1796
    %v1805 = vadd.f32 %v1803, %v1804
    %v1806 = vtanh.pop %v1805
    %v1807 = vmul.f32 %v1802, %v1806
    %s1808 = scalar_lea.vmem [#allocation6], 40
    %1809 = vst [vmem:[%s1808] sm:$0xff] %v1807
    %s1810 = smul.u32 6, 4
    %s1811 = smul.addr %s1810, 8
    %s1812 = scalar_lea.vmem [#allocation2], %s1811
    %v1813 = vld [vmem:[%s1812] sm:$0xff]
    %v1814 = vld [vmem:[%s1812 + $0x8] sm:$0xff]
    %v1815 = vld [vmem:[%s1812 + $0x10] sm:$0xff]
    %v1816 = vld [vmem:[%s1812 + $0x18] sm:$0xff]
    %v1817 = vld [vmem:[#allocation3] sm:$0xff]
    %v1818 = vld [vmem:[#allocation3 + $0x8] sm:$0xff]
    %v1819 = vld [vmem:[#allocation3 + $0x10] sm:$0xff]
    %v1820 = vld [vmem:[#allocation3 + $0x18] sm:$0xff]
    %v1821 = vld [vmem:[#allocation3 + $0x20] sm:$0xff]
    %v1822 = vld [vmem:[#allocation3 + $0x28] sm:$0xff]
    %v1823 = vld [vmem:[#allocation3 + $0x30] sm:$0xff]
    %v1824 = vld [vmem:[#allocation3 + $0x38] sm:$0xff]
    %v1825 = vld [vmem:[#allocation3 + $0x40] sm:$0xff]
    %v1826 = vld [vmem:[#allocation3 + $0x48] sm:$0xff]
    %v1827 = vld [vmem:[#allocation3 + $0x50] sm:$0xff]
    %v1828 = vld [vmem:[#allocation3 + $0x58] sm:$0xff]
    %v1829 = vld [vmem:[#allocation3 + $0x60] sm:$0xff]
    %v1830 = vld [vmem:[#allocation3 + $0x68] sm:$0xff]
    %v1831 = vld [vmem:[#allocation3 + $0x70] sm:$0xff]
    %v1832 = vld [vmem:[#allocation3 + $0x78] sm:$0xff]
    %v1833 = vld [vmem:[#allocation3 + $0x80] sm:$0xff]
    %v1834 = vld [vmem:[#allocation3 + $0x88] sm:$0xff]
    %v1835 = vld [vmem:[#allocation3 + $0x90] sm:$0xff]
    %v1836 = vld [vmem:[#allocation3 + $0x98] sm:$0xff]
    %v1837 = vld [vmem:[#allocation3 + $0xa0] sm:$0xff]
    %v1838 = vld [vmem:[#allocation3 + $0xa8] sm:$0xff]
    %v1839 = vld [vmem:[#allocation3 + $0xb0] sm:$0xff]
    %v1840 = vld [vmem:[#allocation3 + $0xb8] sm:$0xff]
    %v1841 = vld [vmem:[#allocation3 + $0xc0] sm:$0xff]
    %v1842 = vld [vmem:[#allocation3 + $0xc8] sm:$0xff]
    %v1843 = vld [vmem:[#allocation3 + $0xd0] sm:$0xff]
    %v1844 = vld [vmem:[#allocation3 + $0xd8] sm:$0xff]
    %v1845 = vld [vmem:[#allocation3 + $0xe0] sm:$0xff]
    %v1846 = vld [vmem:[#allocation3 + $0xe8] sm:$0xff]
    %v1847 = vld [vmem:[#allocation3 + $0xf0] sm:$0xff]
    %v1848 = vld [vmem:[#allocation3 + $0xf8] sm:$0xff]
    %v1849 = vld [vmem:[#allocation3 + $0x100] sm:$0xff]
    %v1850 = vld [vmem:[#allocation3 + $0x108] sm:$0xff]
    %v1851 = vld [vmem:[#allocation3 + $0x110] sm:$0xff]
    %v1852 = vld [vmem:[#allocation3 + $0x118] sm:$0xff]
    %v1853 = vld [vmem:[#allocation3 + $0x120] sm:$0xff]
    %v1854 = vld [vmem:[#allocation3 + $0x128] sm:$0xff]
    %v1855 = vld [vmem:[#allocation3 + $0x130] sm:$0xff]
    %v1856 = vld [vmem:[#allocation3 + $0x138] sm:$0xff]
    %v1857 = vld [vmem:[#allocation3 + $0x140] sm:$0xff]
    %v1858 = vld [vmem:[#allocation3 + $0x148] sm:$0xff]
    %v1859 = vld [vmem:[#allocation3 + $0x150] sm:$0xff]
    %v1860 = vld [vmem:[#allocation3 + $0x158] sm:$0xff]
    %v1861 = vld [vmem:[#allocation3 + $0x160] sm:$0xff]
    %v1862 = vld [vmem:[#allocation3 + $0x168] sm:$0xff]
    %v1863 = vld [vmem:[#allocation3 + $0x170] sm:$0xff]
    %v1864 = vld [vmem:[#allocation3 + $0x178] sm:$0xff]
    %v1865 = vld [vmem:[#allocation3 + $0x180] sm:$0xff]
    %v1866 = vld [vmem:[#allocation3 + $0x188] sm:$0xff]
    %v1867 = vld [vmem:[#allocation3 + $0x190] sm:$0xff]
    %v1868 = vld [vmem:[#allocation3 + $0x198] sm:$0xff]
    %v1869 = vld [vmem:[#allocation3 + $0x1a0] sm:$0xff]
    %v1870 = vld [vmem:[#allocation3 + $0x1a8] sm:$0xff]
    %v1871 = vld [vmem:[#allocation3 + $0x1b0] sm:$0xff]
    %v1872 = vld [vmem:[#allocation3 + $0x1b8] sm:$0xff]
    %v1873 = vld [vmem:[#allocation3 + $0x1c0] sm:$0xff]
    %v1874 = vld [vmem:[#allocation3 + $0x1c8] sm:$0xff]
    %v1875 = vld [vmem:[#allocation3 + $0x1d0] sm:$0xff]
    %v1876 = vld [vmem:[#allocation3 + $0x1d8] sm:$0xff]
    %v1877 = vld [vmem:[#allocation3 + $0x1e0] sm:$0xff]
    %v1878 = vld [vmem:[#allocation3 + $0x1e8] sm:$0xff]
    %v1879 = vld [vmem:[#allocation3 + $0x1f0] sm:$0xff]
    %v1880 = vld [vmem:[#allocation3 + $0x1f8] sm:$0xff]
    %1881 = vmatprep.subr.mxu0 %v1878
    %1882 = vmatpush1.msra.mxu0 %v1877
    %1883 = vmatprep.subr.mxu0 %v1874
    %1884 = vmatpush1.msra.mxu0 %v1873
    %1885 = vmatprep.subr.mxu0 %v1870
    %1886 = vmatpush1.msra.mxu0 %v1869
    %1887 = vmatprep.subr.mxu0 %v1866
    %1888 = vmatpush1.msra.mxu0 %v1865
    %1889 = vmatprep.subr.mxu0 %v1862
    %1890 = vmatpush1.msra.mxu0 %v1861
    %1891 = vmatprep.subr.mxu0 %v1858
    %1892 = vmatpush1.msra.mxu0 %v1857
    %1893 = vmatprep.subr.mxu0 %v1854
    %1894 = vmatpush1.msra.mxu0 %v1853
    %1895 = vmatprep.subr.mxu0 %v1850
    %1896 = vmatpush1.msra.mxu0 %v1849
    %1897 = vmatprep.subr.mxu0 %v1846
    %1898 = vmatpush1.msra.mxu0 %v1845
    %1899 = vmatprep.subr.mxu0 %v1842
    %1900 = vmatpush1.msra.mxu0 %v1841
    %1901 = vmatprep.subr.mxu0 %v1838
    %1902 = vmatpush1.msra.mxu0 %v1837
    %1903 = vmatprep.subr.mxu0 %v1834
    %1904 = vmatpush1.msra.mxu0 %v1833
    %1905 = vmatprep.subr.mxu0 %v1830
    %1906 = vmatpush1.msra.mxu0 %v1829
    %1907 = vmatprep.subr.mxu0 %v1826
    %1908 = vmatpush1.msra.mxu0 %v1825
    %1909 = vmatprep.subr.mxu0 %v1822
    %1910 = vmatpush1.msra.mxu0 %v1821
    %1911 = vmatprep.subr.mxu0 %v1818
    %1912 = vmatpush1.msra.mxu0 %v1817
    %1913 = vmatprep.subr.mxu0 0.0
    %1914 = vmatpush2.msra.mxu0 0.0
    %1915 = vmatprep.subr.mxu0 0.0
    %1916 = vmatpush2.msra.mxu0 0.0
    %1917 = vmatprep.subr.mxu0 0.0
    %1918 = vmatpush2.msra.mxu0 0.0
    %1919 = vmatprep.subr.mxu0 0.0
    %1920 = vmatpush2.msra.mxu0 0.0
    %1921 = vmatprep.subr.mxu0 0.0
    %1922 = vmatpush2.msra.mxu0 0.0
    %1923 = vmatprep.subr.mxu0 0.0
    %1924 = vmatpush2.msra.mxu0 0.0
    %1925 = vmatprep.subr.mxu0 0.0
    %1926 = vmatpush2.msra.mxu0 0.0
    %1927 = vmatprep.subr.mxu0 0.0
    %1928 = vmatpush2.msra.mxu0 0.0
    %1929 = vmatprep.subr.mxu0 0.0
    %1930 = vmatpush2.msra.mxu0 0.0
    %1931 = vmatprep.subr.mxu0 0.0
    %1932 = vmatpush2.msra.mxu0 0.0
    %1933 = vmatprep.subr.mxu0 0.0
    %1934 = vmatpush2.msra.mxu0 0.0
    %1935 = vmatprep.subr.mxu0 0.0
    %1936 = vmatpush2.msra.mxu0 0.0
    %1937 = vmatprep.subr.mxu0 0.0
    %1938 = vmatpush2.msra.mxu0 0.0
    %1939 = vmatprep.subr.mxu0 0.0
    %1940 = vmatpush2.msra.mxu0 0.0
    %1941 = vmatprep.subr.mxu0 0.0
    %1942 = vmatpush2.msra.mxu0 0.0
    %1943 = vmatprep.subr.mxu0 0.0
    %1944 = vmatpush2.msra.mxu0 0.0
    %1945 = vmatprep.mubr.f32.mxu0 0.0
    %1946 = vmatmul.mubr.f32.gmra.mxu0 %v1807
    %v1947 = vpop.f32.mrf.mxu0
    %v1948 = vadd.f32 0.0, %v1947
    %v1949 = vpop.f32.mrf.mxu0
    %v1950 = vadd.f32 0.0, %v1949
    %1951 = vdwg.mxu0
    %1952 = vmatprep.subr.mxu0 %v1880
    %1953 = vmatpush1.msra.mxu0 %v1879
    %1954 = vmatprep.subr.mxu0 %v1876
    %1955 = vmatpush1.msra.mxu0 %v1875
    %1956 = vmatprep.subr.mxu0 %v1872
    %1957 = vmatpush1.msra.mxu0 %v1871
    %1958 = vmatprep.subr.mxu0 %v1868
    %1959 = vmatpush1.msra.mxu0 %v1867
    %1960 = vmatprep.subr.mxu0 %v1864
    %1961 = vmatpush1.msra.mxu0 %v1863
    %1962 = vmatprep.subr.mxu0 %v1860
    %1963 = vmatpush1.msra.mxu0 %v1859
    %1964 = vmatprep.subr.mxu0 %v1856
    %1965 = vmatpush1.msra.mxu0 %v1855
    %1966 = vmatprep.subr.mxu0 %v1852
    %1967 = vmatpush1.msra.mxu0 %v1851
    %1968 = vmatprep.subr.mxu0 %v1848
    %1969 = vmatpush1.msra.mxu0 %v1847
    %1970 = vmatprep.subr.mxu0 %v1844
    %1971 = vmatpush1.msra.mxu0 %v1843
    %1972 = vmatprep.subr.mxu0 %v1840
    %1973 = vmatpush1.msra.mxu0 %v1839
    %1974 = vmatprep.subr.mxu0 %v1836
    %1975 = vmatpush1.msra.mxu0 %v1835
    %1976 = vmatprep.subr.mxu0 %v1832
    %1977 = vmatpush1.msra.mxu0 %v1831
    %1978 = vmatprep.subr.mxu0 %v1828
    %1979 = vmatpush1.msra.mxu0 %v1827
    %1980 = vmatprep.subr.mxu0 %v1824
    %1981 = vmatpush1.msra.mxu0 %v1823
    %1982 = vmatprep.subr.mxu0 %v1820
    %1983 = vmatpush1.msra.mxu0 %v1819
    %1984 = vmatprep.subr.mxu0 0.0
    %1985 = vmatpush2.msra.mxu0 0.0
    %1986 = vmatprep.subr.mxu0 0.0
    %1987 = vmatpush2.msra.mxu0 0.0
    %1988 = vmatprep.subr.mxu0 0.0
    %1989 = vmatpush2.msra.mxu0 0.0
    %1990 = vmatprep.subr.mxu0 0.0
    %1991 = vmatpush2.msra.mxu0 0.0
    %1992 = vmatprep.subr.mxu0 0.0
    %1993 = vmatpush2.msra.mxu0 0.0
    %1994 = vmatprep.subr.mxu0 0.0
    %1995 = vmatpush2.msra.mxu0 0.0
    %1996 = vmatprep.subr.mxu0 0.0
    %1997 = vmatpush2.msra.mxu0 0.0
    %1998 = vmatprep.subr.mxu0 0.0
    %1999 = vmatpush2.msra.mxu0 0.0
    %2000 = vmatprep.subr.mxu0 0.0
    %2001 = vmatpush2.msra.mxu0 0.0
    %2002 = vmatprep.subr.mxu0 0.0
    %2003 = vmatpush2.msra.mxu0 0.0
    %2004 = vmatprep.subr.mxu0 0.0
    %2005 = vmatpush2.msra.mxu0 0.0
    %2006 = vmatprep.subr.mxu0 0.0
    %2007 = vmatpush2.msra.mxu0 0.0
    %2008 = vmatprep.subr.mxu0 0.0
    %2009 = vmatpush2.msra.mxu0 0.0
    %2010 = vmatprep.subr.mxu0 0.0
    %2011 = vmatpush2.msra.mxu0 0.0
    %2012 = vmatprep.subr.mxu0 0.0
    %2013 = vmatpush2.msra.mxu0 0.0
    %2014 = vmatprep.subr.mxu0 0.0
    %2015 = vmatpush2.msra.mxu0 0.0
    %2016 = vmatprep.mubr.f32.mxu0 0.0
    %2017 = vmatmul.mubr.f32.gmra.mxu0 %v1807
    %v2018 = vpop.f32.mrf.mxu0
    %v2019 = vadd.f32 0.0, %v2018
    %v2020 = vpop.f32.mrf.mxu0
    %v2021 = vadd.f32 0.0, %v2020
    %2022 = vdwg.mxu0
    %v2023 = vadd.f32 %v1813, %v1948
    %v2024 = vadd.f32 %v1814, %v1950
    %v2025 = vadd.f32 %v1815, %v2019
    %v2026 = vadd.f32 %v1816, %v2021
    %v2027 = vxor.u32 %v2023, 2147483648
    %v2028 = vmul.f32 %v2027, 1.442695
    %v2029 = vpow.pop %v2028
    %v2030 = vadd.f32 %v2029, 1.0
    %v2031 = vrcp.pop %v2030
    %v2032 = vmul.f32 1.0, %v2031
    %v2033 = vxor.u32 %v2024, 2147483648
    %v2034 = vmul.f32 %v2033, 1.442695
    %v2035 = vpow.pop %v2034
    %v2036 = vadd.f32 %v2035, 1.0
    %v2037 = vrcp.pop %v2036
    %v2038 = vmul.f32 1.0, %v2037
    %v2039 = vtanh.pop %v2025
    %v2040 = vxor.u32 %v2026, 2147483648
    %v2041 = vmul.f32 %v2040, 1.442695
    %v2042 = vpow.pop %v2041
    %v2043 = vadd.f32 %v2042, 1.0
    %v2044 = vrcp.pop %v2043
    %v2045 = vmul.f32 1.0, %v2044
    %v2046 = vmul.f32 %v2038, %v1805
    %v2047 = vmul.f32 %v2032, %v2039
    %v2048 = vadd.f32 %v2046, %v2047
    %v2049 = vtanh.pop %v2048
    %v2050 = vmul.f32 %v2045, %v2049
    %s2051 = scalar_lea.vmem [#allocation6], 48
    %2052 = vst [vmem:[%s2051] sm:$0xff] %v2050
    %s2053 = smul.u32 7, 4
    %s2054 = smul.addr %s2053, 8
    %s2055 = scalar_lea.vmem [#allocation2], %s2054
    %v2056 = vld [vmem:[%s2055] sm:$0xff]
    %v2057 = vld [vmem:[%s2055 + $0x8] sm:$0xff]
    %v2058 = vld [vmem:[%s2055 + $0x10] sm:$0xff]
    %v2059 = vld [vmem:[%s2055 + $0x18] sm:$0xff]
    %v2060 = vld [vmem:[#allocation3] sm:$0xff]
    %v2061 = vld [vmem:[#allocation3 + $0x8] sm:$0xff]
    %v2062 = vld [vmem:[#allocation3 + $0x10] sm:$0xff]
    %v2063 = vld [vmem:[#allocation3 + $0x18] sm:$0xff]
    %v2064 = vld [vmem:[#allocation3 + $0x20] sm:$0xff]
    %v2065 = vld [vmem:[#allocation3 + $0x28] sm:$0xff]
    %v2066 = vld [vmem:[#allocation3 + $0x30] sm:$0xff]
    %v2067 = vld [vmem:[#allocation3 + $0x38] sm:$0xff]
    %v2068 = vld [vmem:[#allocation3 + $0x40] sm:$0xff]
    %v2069 = vld [vmem:[#allocation3 + $0x48] sm:$0xff]
    %v2070 = vld [vmem:[#allocation3 + $0x50] sm:$0xff]
    %v2071 = vld [vmem:[#allocation3 + $0x58] sm:$0xff]
    %v2072 = vld [vmem:[#allocation3 + $0x60] sm:$0xff]
    %v2073 = vld [vmem:[#allocation3 + $0x68] sm:$0xff]
    %v2074 = vld [vmem:[#allocation3 + $0x70] sm:$0xff]
    %v2075 = vld [vmem:[#allocation3 + $0x78] sm:$0xff]
    %v2076 = vld [vmem:[#allocation3 + $0x80] sm:$0xff]
    %v2077 = vld [vmem:[#allocation3 + $0x88] sm:$0xff]
    %v2078 = vld [vmem:[#allocation3 + $0x90] sm:$0xff]
    %v2079 = vld [vmem:[#allocation3 + $0x98] sm:$0xff]
    %v2080 = vld [vmem:[#allocation3 + $0xa0] sm:$0xff]
    %v2081 = vld [vmem:[#allocation3 + $0xa8] sm:$0xff]
    %v2082 = vld [vmem:[#allocation3 + $0xb0] sm:$0xff]
    %v2083 = vld [vmem:[#allocation3 + $0xb8] sm:$0xff]
    %v2084 = vld [vmem:[#allocation3 + $0xc0] sm:$0xff]
    %v2085 = vld [vmem:[#allocation3 + $0xc8] sm:$0xff]
    %v2086 = vld [vmem:[#allocation3 + $0xd0] sm:$0xff]
    %v2087 = vld [vmem:[#allocation3 + $0xd8] sm:$0xff]
    %v2088 = vld [vmem:[#allocation3 + $0xe0] sm:$0xff]
    %v2089 = vld [vmem:[#allocation3 + $0xe8] sm:$0xff]
    %v2090 = vld [vmem:[#allocation3 + $0xf0] sm:$0xff]
    %v2091 = vld [vmem:[#allocation3 + $0xf8] sm:$0xff]
    %v2092 = vld [vmem:[#allocation3 + $0x100] sm:$0xff]
    %v2093 = vld [vmem:[#allocation3 + $0x108] sm:$0xff]
    %v2094 = vld [vmem:[#allocation3 + $0x110] sm:$0xff]
    %v2095 = vld [vmem:[#allocation3 + $0x118] sm:$0xff]
    %v2096 = vld [vmem:[#allocation3 + $0x120] sm:$0xff]
    %v2097 = vld [vmem:[#allocation3 + $0x128] sm:$0xff]
    %v2098 = vld [vmem:[#allocation3 + $0x130] sm:$0xff]
    %v2099 = vld [vmem:[#allocation3 + $0x138] sm:$0xff]
    %v2100 = vld [vmem:[#allocation3 + $0x140] sm:$0xff]
    %v2101 = vld [vmem:[#allocation3 + $0x148] sm:$0xff]
    %v2102 = vld [vmem:[#allocation3 + $0x150] sm:$0xff]
    %v2103 = vld [vmem:[#allocation3 + $0x158] sm:$0xff]
    %v2104 = vld [vmem:[#allocation3 + $0x160] sm:$0xff]
    %v2105 = vld [vmem:[#allocation3 + $0x168] sm:$0xff]
    %v2106 = vld [vmem:[#allocation3 + $0x170] sm:$0xff]
    %v2107 = vld [vmem:[#allocation3 + $0x178] sm:$0xff]
    %v2108 = vld [vmem:[#allocation3 + $0x180] sm:$0xff]
    %v2109 = vld [vmem:[#allocation3 + $0x188] sm:$0xff]
    %v2110 = vld [vmem:[#allocation3 + $0x190] sm:$0xff]
    %v2111 = vld [vmem:[#allocation3 + $0x198] sm:$0xff]
    %v2112 = vld [vmem:[#allocation3 + $0x1a0] sm:$0xff]
    %v2113 = vld [vmem:[#allocation3 + $0x1a8] sm:$0xff]
    %v2114 = vld [vmem:[#allocation3 + $0x1b0] sm:$0xff]
    %v2115 = vld [vmem:[#allocation3 + $0x1b8] sm:$0xff]
    %v2116 = vld [vmem:[#allocation3 + $0x1c0] sm:$0xff]
    %v2117 = vld [vmem:[#allocation3 + $0x1c8] sm:$0xff]
    %v2118 = vld [vmem:[#allocation3 + $0x1d0] sm:$0xff]
    %v2119 = vld [vmem:[#allocation3 + $0x1d8] sm:$0xff]
    %v2120 = vld [vmem:[#allocation3 + $0x1e0] sm:$0xff]
    %v2121 = vld [vmem:[#allocation3 + $0x1e8] sm:$0xff]
    %v2122 = vld [vmem:[#allocation3 + $0x1f0] sm:$0xff]
    %v2123 = vld [vmem:[#allocation3 + $0x1f8] sm:$0xff]
    %2124 = vmatprep.subr.mxu0 %v2121
    %2125 = vmatpush1.msra.mxu0 %v2120
    %2126 = vmatprep.subr.mxu0 %v2117
    %2127 = vmatpush1.msra.mxu0 %v2116
    %2128 = vmatprep.subr.mxu0 %v2113
    %2129 = vmatpush1.msra.mxu0 %v2112
    %2130 = vmatprep.subr.mxu0 %v2109
    %2131 = vmatpush1.msra.mxu0 %v2108
    %2132 = vmatprep.subr.mxu0 %v2105
    %2133 = vmatpush1.msra.mxu0 %v2104
    %2134 = vmatprep.subr.mxu0 %v2101
    %2135 = vmatpush1.msra.mxu0 %v2100
    %2136 = vmatprep.subr.mxu0 %v2097
    %2137 = vmatpush1.msra.mxu0 %v2096
    %2138 = vmatprep.subr.mxu0 %v2093
    %2139 = vmatpush1.msra.mxu0 %v2092
    %2140 = vmatprep.subr.mxu0 %v2089
    %2141 = vmatpush1.msra.mxu0 %v2088
    %2142 = vmatprep.subr.mxu0 %v2085
    %2143 = vmatpush1.msra.mxu0 %v2084
    %2144 = vmatprep.subr.mxu0 %v2081
    %2145 = vmatpush1.msra.mxu0 %v2080
    %2146 = vmatprep.subr.mxu0 %v2077
    %2147 = vmatpush1.msra.mxu0 %v2076
    %2148 = vmatprep.subr.mxu0 %v2073
    %2149 = vmatpush1.msra.mxu0 %v2072
    %2150 = vmatprep.subr.mxu0 %v2069
    %2151 = vmatpush1.msra.mxu0 %v2068
    %2152 = vmatprep.subr.mxu0 %v2065
    %2153 = vmatpush1.msra.mxu0 %v2064
    %2154 = vmatprep.subr.mxu0 %v2061
    %2155 = vmatpush1.msra.mxu0 %v2060
    %2156 = vmatprep.subr.mxu0 0.0
    %2157 = vmatpush2.msra.mxu0 0.0
    %2158 = vmatprep.subr.mxu0 0.0
    %2159 = vmatpush2.msra.mxu0 0.0
    %2160 = vmatprep.subr.mxu0 0.0
    %2161 = vmatpush2.msra.mxu0 0.0
    %2162 = vmatprep.subr.mxu0 0.0
    %2163 = vmatpush2.msra.mxu0 0.0
    %2164 = vmatprep.subr.mxu0 0.0
    %2165 = vmatpush2.msra.mxu0 0.0
    %2166 = vmatprep.subr.mxu0 0.0
    %2167 = vmatpush2.msra.mxu0 0.0
    %2168 = vmatprep.subr.mxu0 0.0
    %2169 = vmatpush2.msra.mxu0 0.0
    %2170 = vmatprep.subr.mxu0 0.0
    %2171 = vmatpush2.msra.mxu0 0.0
    %2172 = vmatprep.subr.mxu0 0.0
    %2173 = vmatpush2.msra.mxu0 0.0
    %2174 = vmatprep.subr.mxu0 0.0
    %2175 = vmatpush2.msra.mxu0 0.0
    %2176 = vmatprep.subr.mxu0 0.0
    %2177 = vmatpush2.msra.mxu0 0.0
    %2178 = vmatprep.subr.mxu0 0.0
    %2179 = vmatpush2.msra.mxu0 0.0
    %2180 = vmatprep.subr.mxu0 0.0
    %2181 = vmatpush2.msra.mxu0 0.0
    %2182 = vmatprep.subr.mxu0 0.0
    %2183 = vmatpush2.msra.mxu0 0.0
    %2184 = vmatprep.subr.mxu0 0.0
    %2185 = vmatpush2.msra.mxu0 0.0
    %2186 = vmatprep.subr.mxu0 0.0
    %2187 = vmatpush2.msra.mxu0 0.0
    %2188 = vmatprep.mubr.f32.mxu0 0.0
    %2189 = vmatmul.mubr.f32.gmra.mxu0 %v2050
    %v2190 = vpop.f32.mrf.mxu0
    %v2191 = vadd.f32 0.0, %v2190
    %v2192 = vpop.f32.mrf.mxu0
    %v2193 = vadd.f32 0.0, %v2192
    %2194 = vdwg.mxu0
    %2195 = vmatprep.subr.mxu0 %v2123
    %2196 = vmatpush1.msra.mxu0 %v2122
    %2197 = vmatprep.subr.mxu0 %v2119
    %2198 = vmatpush1.msra.mxu0 %v2118
    %2199 = vmatprep.subr.mxu0 %v2115
    %2200 = vmatpush1.msra.mxu0 %v2114
    %2201 = vmatprep.subr.mxu0 %v2111
    %2202 = vmatpush1.msra.mxu0 %v2110
    %2203 = vmatprep.subr.mxu0 %v2107
    %2204 = vmatpush1.msra.mxu0 %v2106
    %2205 = vmatprep.subr.mxu0 %v2103
    %2206 = vmatpush1.msra.mxu0 %v2102
    %2207 = vmatprep.subr.mxu0 %v2099
    %2208 = vmatpush1.msra.mxu0 %v2098
    %2209 = vmatprep.subr.mxu0 %v2095
    %2210 = vmatpush1.msra.mxu0 %v2094
    %2211 = vmatprep.subr.mxu0 %v2091
    %2212 = vmatpush1.msra.mxu0 %v2090
    %2213 = vmatprep.subr.mxu0 %v2087
    %2214 = vmatpush1.msra.mxu0 %v2086
    %2215 = vmatprep.subr.mxu0 %v2083
    %2216 = vmatpush1.msra.mxu0 %v2082
    %2217 = vmatprep.subr.mxu0 %v2079
    %2218 = vmatpush1.msra.mxu0 %v2078
    %2219 = vmatprep.subr.mxu0 %v2075
    %2220 = vmatpush1.msra.mxu0 %v2074
    %2221 = vmatprep.subr.mxu0 %v2071
    %2222 = vmatpush1.msra.mxu0 %v2070
    %2223 = vmatprep.subr.mxu0 %v2067
    %2224 = vmatpush1.msra.mxu0 %v2066
    %2225 = vmatprep.subr.mxu0 %v2063
    %2226 = vmatpush1.msra.mxu0 %v2062
    %2227 = vmatprep.subr.mxu0 0.0
    %2228 = vmatpush2.msra.mxu0 0.0
    %2229 = vmatprep.subr.mxu0 0.0
    %2230 = vmatpush2.msra.mxu0 0.0
    %2231 = vmatprep.subr.mxu0 0.0
    %2232 = vmatpush2.msra.mxu0 0.0
    %2233 = vmatprep.subr.mxu0 0.0
    %2234 = vmatpush2.msra.mxu0 0.0
    %2235 = vmatprep.subr.mxu0 0.0
    %2236 = vmatpush2.msra.mxu0 0.0
    %2237 = vmatprep.subr.mxu0 0.0
    %2238 = vmatpush2.msra.mxu0 0.0
    %2239 = vmatprep.subr.mxu0 0.0
    %2240 = vmatpush2.msra.mxu0 0.0
    %2241 = vmatprep.subr.mxu0 0.0
    %2242 = vmatpush2.msra.mxu0 0.0
    %2243 = vmatprep.subr.mxu0 0.0
    %2244 = vmatpush2.msra.mxu0 0.0
    %2245 = vmatprep.subr.mxu0 0.0
    %2246 = vmatpush2.msra.mxu0 0.0
    %2247 = vmatprep.subr.mxu0 0.0
    %2248 = vmatpush2.msra.mxu0 0.0
    %2249 = vmatprep.subr.mxu0 0.0
    %2250 = vmatpush2.msra.mxu0 0.0
    %2251 = vmatprep.subr.mxu0 0.0
    %2252 = vmatpush2.msra.mxu0 0.0
    %2253 = vmatprep.subr.mxu0 0.0
    %2254 = vmatpush2.msra.mxu0 0.0
    %2255 = vmatprep.subr.mxu0 0.0
    %2256 = vmatpush2.msra.mxu0 0.0
    %2257 = vmatprep.subr.mxu0 0.0
    %2258 = vmatpush2.msra.mxu0 0.0
    %2259 = vmatprep.mubr.f32.mxu0 0.0
    %2260 = vmatmul.mubr.f32.gmra.mxu0 %v2050
    %v2261 = vpop.f32.mrf.mxu0
    %v2262 = vadd.f32 0.0, %v2261
    %v2263 = vpop.f32.mrf.mxu0
    %v2264 = vadd.f32 0.0, %v2263
    %2265 = vdwg.mxu0
    %v2266 = vadd.f32 %v2056, %v2191
    %v2267 = vadd.f32 %v2057, %v2193
    %v2268 = vadd.f32 %v2058, %v2262
    %v2269 = vadd.f32 %v2059, %v2264
    %v2270 = vxor.u32 %v2266, 2147483648
    %v2271 = vmul.f32 %v2270, 1.442695
    %v2272 = vpow.pop %v2271
    %v2273 = vadd.f32 %v2272, 1.0
    %v2274 = vrcp.pop %v2273
    %v2275 = vmul.f32 1.0, %v2274
    %v2276 = vxor.u32 %v2267, 2147483648
    %v2277 = vmul.f32 %v2276, 1.442695
    %v2278 = vpow.pop %v2277
    %v2279 = vadd.f32 %v2278, 1.0
    %v2280 = vrcp.pop %v2279
    %v2281 = vmul.f32 1.0, %v2280
    %v2282 = vtanh.pop %v2268
    %v2283 = vxor.u32 %v2269, 2147483648
    %v2284 = vmul.f32 %v2283, 1.442695
    %v2285 = vpow.pop %v2284
    %v2286 = vadd.f32 %v2285, 1.0
    %v2287 = vrcp.pop %v2286
    %v2288 = vmul.f32 1.0, %v2287
    %v2289 = vmul.f32 %v2281, %v2048
    %v2290 = vmul.f32 %v2275, %v2282
    %v2291 = vadd.f32 %v2289, %v2290
    %v2292 = vtanh.pop %v2291
    %v2293 = vmul.f32 %v2288, %v2292
    %s2294 = scalar_lea.vmem [#allocation6], 56
    %2295 = vst [vmem:[%s2294] sm:$0xff] %v2293
    // Predicated region
    $region22: #{tpu_custom_call.1} parent=1 // pred_check
      _
    $region23: #{tpu_custom_call.1} parent=1 // pred_check_branch
      %2297 = sbr.rel (0) target = $region25
    $region24: #{tpu_custom_call.1} parent=1 // pred_region
      %s2299 = ssub.s32 1024, 1024
      %2300 = vsyncadd [#allocation5], %s2299
      %s2301 = sshll.u32 [#allocation6], 4
      %s2302 = int_to_ptr.vmem [resolvable:$true] %s2301
      %2307 = dma.vmem_to_hbm [thread:$0]  %s2302, 1024, %s4, [#allocation5], 128, 128, 8
    $region25: #{tpu_custom_call.1} parent=1 // pred_fallthru
      _
    // Predicated region
    $region26: #{tpu_custom_call.1} parent=1 // pred_check
      _
    $region27: #{tpu_custom_call.1} parent=1 // pred_check_branch
      %2309 = sbr.rel (0) target = $region29
    $region28: #{tpu_custom_call.1} parent=1 // pred_region
      %2310 = dma.done [#allocation5], 1024
    $region29: #{tpu_custom_call.1} parent=1 // pred_fallthru
      _
    %2311 = vsyncpa [#allocation4], 1
    %2312 = vsyncpa [#allocation5], 1

</llo_original>
